<compile_context>
chip_gen: v5e
topology: v5e:2x2
jax: 0.10.0
libtpu: 0.0.40
codegen_flags: <defaults>
</compile_context>

<pallas_src>
import jax
import jax.numpy as jnp
from jax import lax
from jax.experimental import pallas as pl
from jax.experimental.pallas import tpu as pltpu


def _sigmoid(v):
    return 1.0 / (1.0 + jnp.exp(-v))


def _make_kernel(C, Cmid, H, W):
    HW = H * W

    def kernel(x_ref, w1_ref, b1_ref, w2_ref, wf_ref, w3_ref, b3_ref, out_ref):
        x = x_ref[0]                                            # (C, HW) f32, lane-dense spatial

        # ---------------- channel attention (squeeze-excite) ----------------
        gap = jnp.mean(x, axis=1, keepdims=True)                # (C, 1)   global average pool
        # conv1x1_1 with BN folded:  h[m] = sum_c w1[c, m] * gap[c] + b1[m]
        h = jnp.sum(w1_ref[...] * gap, axis=0, keepdims=True) + b1_ref[...]     # (1, Cmid)
        spikes = jnp.where(h > 1.0, 1.0, 0.0).astype(jnp.float32)               # LIF, V_th = 1.0
        # conv1x1_2: a[c] = sigmoid(sum_m w2[c, m] * spike[m])
        a = _sigmoid(jnp.sum(w2_ref[...] * spikes, axis=1, keepdims=True))       # (C, 1)

        # ---------------- spatial attention (mean/max over C + 3x3 conv) ----------------
        mean_c = jnp.mean(x, axis=0, keepdims=True)             # (1, HW)
        max_c = jnp.max(x, axis=0, keepdims=True)               # (1, HW)

        lane = lax.broadcasted_iota(jnp.int32, (1, HW), 1)
        if (W & (W - 1)) == 0:                                  # static choice
            col = jnp.bitwise_and(lane, W - 1)
        else:
            col = lane % W

        s_pre = jnp.zeros((1, HW), jnp.float32)
        for dh in (-1, 0, 1):
            for dw in (-1, 0, 1):
                idx = (dh + 1) * 3 + (dw + 1)
                wm = w3_ref[idx]                                # tap weight, channel-mean map
                wx = w3_ref[9 + idx]                            # tap weight, channel-max map
                d = dh * W + dw
                if d == 0:
                    sm, sx = mean_c, max_c
                else:
                    sm = pltpu.roll(mean_c, shift=(-d) % HW, axis=1)
                    sx = pltpu.roll(max_c, shift=(-d) % HW, axis=1)
                term = wm * sm + wx * sx
                conds = []
                if dh == -1:
                    conds.append(lane >= W)
                elif dh == 1:
                    conds.append(lane < HW - W)
                if dw == -1:
                    conds.append(col >= 1)
                elif dw == 1:
                    conds.append(col <= W - 2)
                if conds:
                    valid = conds[0]
                    for cnd in conds[1:]:
                        valid = jnp.logical_and(valid, cnd)
                    term = jnp.where(valid, term, 0.0)
                s_pre = s_pre + term
        s_map = _sigmoid(s_pre + b3_ref[0])                     # (1, HW)

        # ---------------- fused shared 1x1 conv + residual ----------------
        # Wf @ (x*a) + Wf @ (x*s) == Wf @ (x * (a + s));  lane-dense MXU matmul, N = H*W
        mod = x * (a + s_map)                                   # (C, HW)
        y = x + jnp.dot(wf_ref[...], mod,
                        preferred_element_type=jnp.float32,
                        precision=lax.Precision.HIGHEST)
        out_ref[0] = y.astype(out_ref.dtype)

    return kernel


def feature_enhance_forward(x_nchw, params):
    """x_nchw: (N, C, H, W) float32.  Returns (N, C, H, W) float32."""
    w1f, b1, w2, wf, w3, b3 = params
    N, C, H, W = x_nchw.shape
    HW = H * W
    Cmid = w1f.shape[1]

    x = x_nchw.reshape(N, C, HW).astype(jnp.float32)            # free reshape, no transpose
    kernel = _make_kernel(C, Cmid, H, W)

    out = pl.pallas_call(
        kernel,
        out_shape=jax.ShapeDtypeStruct((N, C, HW), jnp.float32),
        grid_spec=pltpu.PrefetchScalarGridSpec(
            num_scalar_prefetch=0,
            grid=(N,),
            in_specs=[
                pl.BlockSpec((1, C, HW), lambda n: (n, 0, 0)),          # x, one sample per step
                pl.BlockSpec((C, Cmid), lambda n: (0, 0)),              # w1 (BN folded), (C, C//r)
                pl.BlockSpec((1, Cmid), lambda n: (0, 0)),              # b1
                pl.BlockSpec((C, Cmid), lambda n: (0, 0)),              # w2, (C, C//r)
                pl.BlockSpec((C, C), lambda n: (0, 0)),                 # shared 1x1 conv weight
                pl.BlockSpec(memory_space=pltpu.MemorySpace.SMEM),      # 18 conv3x3 taps (BN folded)
                pl.BlockSpec(memory_space=pltpu.MemorySpace.SMEM),      # conv3x3 BN bias (scalar)
            ],
            out_specs=pl.BlockSpec((1, C, HW), lambda n: (n, 0, 0)),
        ),
        compiler_params=pltpu.CompilerParams(dimension_semantics=("parallel",)),
    )(x, w1f, b1, w2, wf, w3, b3)

    return out.reshape(N, C, H, W)


def fold_params(W1, bn1, W2, W3, bn3, Wf, eps=1e-3):
    """Fold eval-mode BatchNorms and repack PyTorch OIHW weights for the kernel."""
    g1, be1, m1, v1 = bn1
    g3, be3, m3, v3 = bn3
    s1 = g1 / jnp.sqrt(v1 + eps)
    b1 = (be1 - m1 * s1).reshape(1, -1).astype(jnp.float32)               # (1, Cmid)
    w1f = (W1[:, :, 0, 0] * s1[:, None]).T.astype(jnp.float32)            # (C, Cmid), BN scale folded
    w2 = W2[:, :, 0, 0].astype(jnp.float32)                               # (C, Cmid)
    wf = Wf[:, :, 0, 0].astype(jnp.float32)                               # (C, C)
    s3 = g3 / jnp.sqrt(v3 + eps)
    b3 = (be3 - m3 * s3).reshape(1).astype(jnp.float32)                   # (1,)
    w3 = (W3[0] * s3[0]).reshape(-1).astype(jnp.float32)                  # (18,) = [mean taps, max taps]
    return w1f, b1, w2, wf, w3, b3


def _reference(x, W1, bn1, W2, W3, bn3, Wf, eps=1e-3):
    """Pure-JAX NCHW reference of FeatureEnhance.forward (eval-mode BN, LIF = x > 1)."""
    g1, be1, m1, v1 = bn1
    g3, be3, m3, v3 = bn3
    dn = ("NCHW", "OIHW", "NCHW")
    hp = lax.Precision.HIGHEST

    gap = jnp.mean(x, axis=(2, 3), keepdims=True)
    h = lax.conv_general_dilated(gap, W1, (1, 1), "VALID", dimension_numbers=dn, precision=hp)
    s1 = g1 / jnp.sqrt(v1 + eps)
    h = h * s1[None, :, None, None] + (be1 - m1 * s1)[None, :, None, None]
    h = (h > 1.0).astype(jnp.float32)                                     # LIF spike
    a = _sigmoid(lax.conv_general_dilated(h, W2, (1, 1), "VALID", dimension_numbers=dn, precision=hp))
    out1 = x * a

    mean_c = jnp.mean(x, axis=1, keepdims=True)
    max_c = jnp.max(x, axis=1, keepdims=True)
    cat = jnp.concatenate([mean_c, max_c], axis=1)                        # (N, 2, H, W)
    s = lax.conv_general_dilated(cat, W3, (1, 1), ((1, 1), (1, 1)), dimension_numbers=dn, precision=hp)
    s3 = g3 / jnp.sqrt(v3 + eps)
    s = _sigmoid(s * s3[None, :, None, None] + (be3 - m3 * s3)[None, :, None, None])
    out2 = x * s

    conv1x1 = lambda t: lax.conv_general_dilated(t, Wf, (1, 1), "VALID",
                                                 dimension_numbers=dn, precision=hp)
    return x + conv1x1(out1) + conv1x1(out2)


if __name__ == "__main__":
    # small shapes consistent with FeatureEnhance(nIn=16, r=4)
    N, C, H, W = 2, 16, 16, 16
    r = 4
    Cmid = C // r

    key = jax.random.PRNGKey(0)
    ks = jax.random.split(key, 13)

    x = jax.random.normal(ks[0], (N, C, H, W), jnp.float32)

    # conv weights in PyTorch OIHW layout (no bias, matching Spike_Conv defaults)
    W1 = 0.3 * jax.random.normal(ks[1], (Cmid, C, 1, 1), jnp.float32)     # conv1x1_1
    W2 = 0.3 * jax.random.normal(ks[2], (C, Cmid, 1, 1), jnp.float32)     # conv1x1_2
    W3 = 0.3 * jax.random.normal(ks[3], (1, 2, 3, 3), jnp.float32)        # conv3x3 (2 -> 1)
    Wf = 0.3 * jax.random.normal(ks[4], (C, C, 1, 1), jnp.float32)        # shared conv1x1

    # BatchNorm2d eval-mode parameters, eps = 0.001
    bn1 = (1.0 + 0.2 * jax.random.normal(ks[5], (Cmid,), jnp.float32),    # gamma
           1.0 + 0.5 * jax.random.normal(ks[6], (Cmid,), jnp.float32),    # beta (near V_th -> mixed spikes)
           0.1 * jax.random.normal(ks[7], (Cmid,), jnp.float32),          # running mean
           1.0 + 0.2 * jax.random.uniform(ks[8], (Cmid,), jnp.float32))   # running var
    bn3 = (1.0 + 0.2 * jax.random.normal(ks[9], (1,), jnp.float32),
           0.2 * jax.random.normal(ks[10], (1,), jnp.float32),
           0.1 * jax.random.normal(ks[11], (1,), jnp.float32),
           1.0 + 0.2 * jax.random.uniform(ks[12], (1,), jnp.float32))

    params = fold_params(W1, bn1, W2, W3, bn3, Wf)

    out = jax.block_until_ready(feature_enhance_forward(x, params))
    ref = jax.block_until_ready(_reference(x, W1, bn1, W2, W3, bn3, Wf))

    assert out.shape == (N, C, H, W)
    max_err = float(jnp.max(jnp.abs(out - ref)))
    assert max_err < 1e-3, f"max abs error too large: {max_err}"

    print("KERNEL_OK")
</pallas_src>

<mosaic_0001>
module attributes {stable_mosaic.version = 11 : i64} {
  func.func @kernel(%arg0: i32, %arg1: memref<1x16x256xf32, #tpu.memory_space<vmem>>, %arg2: memref<16x4xf32, #tpu.memory_space<vmem>>, %arg3: memref<1x4xf32, #tpu.memory_space<vmem>>, %arg4: memref<16x4xf32, #tpu.memory_space<vmem>>, %arg5: memref<16x16xf32, #tpu.memory_space<vmem>>, %arg6: memref<18xf32, #tpu.memory_space<smem>>, %arg7: memref<1xf32, #tpu.memory_space<smem>>, %arg8: memref<1x16x256xf32, #tpu.memory_space<vmem>>) attributes {dimension_semantics = [#tpu.dimension_semantics<parallel>], iteration_bounds = array<i64: 2>, scalar_prefetch = 0 : i64, scratch_operands = 0 : i64, tpu.core_type = #tpu.core_type<tc>, window_params = [{transform_indices = @transform_0, window_bounds = array<i64: 1, 16, 256>}, {pipeline_mode = #tpu.pipeline_mode<synchronous>, transform_indices = @transform_1, window_bounds = array<i64: 16, 4>}, {pipeline_mode = #tpu.pipeline_mode<synchronous>, transform_indices = @transform_2, window_bounds = array<i64: 1, 4>}, {pipeline_mode = #tpu.pipeline_mode<synchronous>, transform_indices = @transform_3, window_bounds = array<i64: 16, 4>}, {pipeline_mode = #tpu.pipeline_mode<synchronous>, transform_indices = @transform_4, window_bounds = array<i64: 16, 16>}, {transform_indices = @transform_5, window_bounds = array<i64: 18>}, {transform_indices = @transform_6, window_bounds = array<i64: 1>}, {transform_indices = @transform_7, window_bounds = array<i64: 1, 16, 256>}]} {
    %c0 = arith.constant 0 : index
    %c0_0 = arith.constant 0 : index
    %c0_1 = arith.constant 0 : index
    %0 = vector.load %arg1[%c0, %c0_0, %c0_1] : memref<1x16x256xf32, #tpu.memory_space<vmem>>, vector<1x16x256xf32>
    %1 = vector.shape_cast %0 : vector<1x16x256xf32> to vector<16x256xf32>
    %cst = arith.constant dense<0.000000e+00> : vector<16xf32>
    %2 = vector.multi_reduction <add>, %1, %cst [1] : vector<16x256xf32> to vector<16xf32>
    %3 = vector.shape_cast %2 : vector<16xf32> to vector<16x1xf32>
    %cst_2 = arith.constant 2.560000e+02 : f32
    %4 = vector.broadcast %cst_2 : f32 to vector<16x1xf32>
    %5 = arith.divf %3, %4 : vector<16x1xf32>
    %c0_3 = arith.constant 0 : index
    %c0_4 = arith.constant 0 : index
    %6 = vector.load %arg2[%c0_3, %c0_4] : memref<16x4xf32, #tpu.memory_space<vmem>>, vector<16x4xf32>
    %7 = vector.broadcast %5 : vector<16x1xf32> to vector<16x4xf32>
    %8 = arith.mulf %6, %7 : vector<16x4xf32>
    %cst_5 = arith.constant dense<0.000000e+00> : vector<4xf32>
    %9 = vector.multi_reduction <add>, %8, %cst_5 [0] : vector<16x4xf32> to vector<4xf32>
    %10 = vector.shape_cast %9 : vector<4xf32> to vector<1x4xf32>
    %c0_6 = arith.constant 0 : index
    %c0_7 = arith.constant 0 : index
    %11 = vector.load %arg3[%c0_6, %c0_7] : memref<1x4xf32, #tpu.memory_space<vmem>>, vector<1x4xf32>
    %12 = arith.addf %10, %11 : vector<1x4xf32>
    %cst_8 = arith.constant 1.000000e+00 : f32
    %13 = vector.broadcast %cst_8 : f32 to vector<1x4xf32>
    %14 = arith.cmpf ogt, %12, %13 : vector<1x4xf32>
    %cst_9 = arith.constant 1.000000e+00 : f32
    %cst_10 = arith.constant 0.000000e+00 : f32
    %15 = vector.broadcast %cst_9 : f32 to vector<1x4xf32>
    %16 = vector.broadcast %cst_10 : f32 to vector<1x4xf32>
    %17 = arith.select %14, %15, %16 : vector<1x4xi1>, vector<1x4xf32>
    %c0_11 = arith.constant 0 : index
    %c0_12 = arith.constant 0 : index
    %18 = vector.load %arg4[%c0_11, %c0_12] : memref<16x4xf32, #tpu.memory_space<vmem>>, vector<16x4xf32>
    %19 = vector.broadcast %17 : vector<1x4xf32> to vector<16x4xf32>
    %20 = arith.mulf %18, %19 : vector<16x4xf32>
    %cst_13 = arith.constant dense<0.000000e+00> : vector<16xf32>
    %21 = vector.multi_reduction <add>, %20, %cst_13 [1] : vector<16x4xf32> to vector<16xf32>
    %22 = vector.shape_cast %21 : vector<16xf32> to vector<16x1xf32>
    %cst_14 = arith.constant 0.000000e+00 : f32
    %23 = vector.broadcast %cst_14 : f32 to vector<16x1xf32>
    %24 = arith.subf %23, %22 : vector<16x1xf32>
    %25 = math.exp %24 : vector<16x1xf32>
    %cst_15 = arith.constant 1.000000e+00 : f32
    %26 = vector.broadcast %cst_15 : f32 to vector<16x1xf32>
    %27 = arith.addf %26, %25 : vector<16x1xf32>
    %cst_16 = arith.constant 1.000000e+00 : f32
    %28 = vector.broadcast %cst_16 : f32 to vector<16x1xf32>
    %29 = arith.divf %28, %27 : vector<16x1xf32>
    %cst_17 = arith.constant dense<0.000000e+00> : vector<256xf32>
    %30 = vector.multi_reduction <add>, %1, %cst_17 [0] : vector<16x256xf32> to vector<256xf32>
    %31 = vector.shape_cast %30 : vector<256xf32> to vector<1x256xf32>
    %cst_18 = arith.constant 1.600000e+01 : f32
    %32 = vector.broadcast %cst_18 : f32 to vector<1x256xf32>
    %33 = arith.divf %31, %32 : vector<1x256xf32>
    %cst_19 = arith.constant dense<0xFF800000> : vector<256xf32>
    %34 = vector.multi_reduction <maximumf>, %1, %cst_19 [0] : vector<16x256xf32> to vector<256xf32>
    %35 = vector.shape_cast %34 : vector<256xf32> to vector<1x256xf32>
    %36 = tpu.iota {dimensions = array<i32: 1>} : vector<1x256xi32>
    %c15_i32 = arith.constant 15 : i32
    %37 = vector.broadcast %c15_i32 : i32 to vector<1x256xi32>
    %38 = arith.andi %36, %37 : vector<1x256xi32>
    %cst_20 = arith.constant 0.000000e+00 : f32
    %39 = vector.broadcast %cst_20 : f32 to vector<1x256xf32>
    %c0_21 = arith.constant 0 : index
    %40 = memref.load %arg6[%c0_21] : memref<18xf32, #tpu.memory_space<smem>>
    %c9 = arith.constant 9 : index
    %41 = memref.load %arg6[%c9] : memref<18xf32, #tpu.memory_space<smem>>
    %c17_i32 = arith.constant 17 : i32
    %42 = tpu.dynamic_rotate %33 by %c17_i32 dim 1 : vector<1x256xf32>, i32 -> vector<1x256xf32>
    %c17_i32_22 = arith.constant 17 : i32
    %43 = tpu.dynamic_rotate %35 by %c17_i32_22 dim 1 : vector<1x256xf32>, i32 -> vector<1x256xf32>
    %44 = vector.broadcast %40 : f32 to vector<1x256xf32>
    %45 = arith.mulf %44, %42 : vector<1x256xf32>
    %46 = vector.broadcast %41 : f32 to vector<1x256xf32>
    %47 = arith.mulf %46, %43 : vector<1x256xf32>
    %48 = arith.addf %45, %47 : vector<1x256xf32>
    %c16_i32 = arith.constant 16 : i32
    %49 = vector.broadcast %c16_i32 : i32 to vector<1x256xi32>
    %50 = arith.cmpi sge, %36, %49 : vector<1x256xi32>
    %c1_i32 = arith.constant 1 : i32
    %51 = vector.broadcast %c1_i32 : i32 to vector<1x256xi32>
    %52 = arith.cmpi sge, %38, %51 : vector<1x256xi32>
    %53 = arith.andi %50, %52 : vector<1x256xi1>
    %cst_23 = arith.constant 0.000000e+00 : f32
    %54 = vector.broadcast %cst_23 : f32 to vector<1x256xf32>
    %55 = arith.select %53, %48, %54 : vector<1x256xi1>, vector<1x256xf32>
    %56 = arith.addf %39, %55 : vector<1x256xf32>
    %c1 = arith.constant 1 : index
    %57 = memref.load %arg6[%c1] : memref<18xf32, #tpu.memory_space<smem>>
    %c10 = arith.constant 10 : index
    %58 = memref.load %arg6[%c10] : memref<18xf32, #tpu.memory_space<smem>>
    %c16_i32_24 = arith.constant 16 : i32
    %59 = tpu.dynamic_rotate %33 by %c16_i32_24 dim 1 : vector<1x256xf32>, i32 -> vector<1x256xf32>
    %c16_i32_25 = arith.constant 16 : i32
    %60 = tpu.dynamic_rotate %35 by %c16_i32_25 dim 1 : vector<1x256xf32>, i32 -> vector<1x256xf32>
    %61 = vector.broadcast %57 : f32 to vector<1x256xf32>
    %62 = arith.mulf %61, %59 : vector<1x256xf32>
    %63 = vector.broadcast %58 : f32 to vector<1x256xf32>
    %64 = arith.mulf %63, %60 : vector<1x256xf32>
    %65 = arith.addf %62, %64 : vector<1x256xf32>
    %c16_i32_26 = arith.constant 16 : i32
    %66 = vector.broadcast %c16_i32_26 : i32 to vector<1x256xi32>
    %67 = arith.cmpi sge, %36, %66 : vector<1x256xi32>
    %cst_27 = arith.constant 0.000000e+00 : f32
    %68 = vector.broadcast %cst_27 : f32 to vector<1x256xf32>
    %69 = arith.select %67, %65, %68 : vector<1x256xi1>, vector<1x256xf32>
    %70 = arith.addf %56, %69 : vector<1x256xf32>
    %c2 = arith.constant 2 : index
    %71 = memref.load %arg6[%c2] : memref<18xf32, #tpu.memory_space<smem>>
    %c11 = arith.constant 11 : index
    %72 = memref.load %arg6[%c11] : memref<18xf32, #tpu.memory_space<smem>>
    %c15_i32_28 = arith.constant 15 : i32
    %73 = tpu.dynamic_rotate %33 by %c15_i32_28 dim 1 : vector<1x256xf32>, i32 -> vector<1x256xf32>
    %c15_i32_29 = arith.constant 15 : i32
    %74 = tpu.dynamic_rotate %35 by %c15_i32_29 dim 1 : vector<1x256xf32>, i32 -> vector<1x256xf32>
    %75 = vector.broadcast %71 : f32 to vector<1x256xf32>
    %76 = arith.mulf %75, %73 : vector<1x256xf32>
    %77 = vector.broadcast %72 : f32 to vector<1x256xf32>
    %78 = arith.mulf %77, %74 : vector<1x256xf32>
    %79 = arith.addf %76, %78 : vector<1x256xf32>
    %c16_i32_30 = arith.constant 16 : i32
    %80 = vector.broadcast %c16_i32_30 : i32 to vector<1x256xi32>
    %81 = arith.cmpi sge, %36, %80 : vector<1x256xi32>
    %c14_i32 = arith.constant 14 : i32
    %82 = vector.broadcast %c14_i32 : i32 to vector<1x256xi32>
    %83 = arith.cmpi sle, %38, %82 : vector<1x256xi32>
    %84 = arith.andi %81, %83 : vector<1x256xi1>
    %cst_31 = arith.constant 0.000000e+00 : f32
    %85 = vector.broadcast %cst_31 : f32 to vector<1x256xf32>
    %86 = arith.select %84, %79, %85 : vector<1x256xi1>, vector<1x256xf32>
    %87 = arith.addf %70, %86 : vector<1x256xf32>
    %c3 = arith.constant 3 : index
    %88 = memref.load %arg6[%c3] : memref<18xf32, #tpu.memory_space<smem>>
    %c12 = arith.constant 12 : index
    %89 = memref.load %arg6[%c12] : memref<18xf32, #tpu.memory_space<smem>>
    %c1_i32_32 = arith.constant 1 : i32
    %90 = tpu.dynamic_rotate %33 by %c1_i32_32 dim 1 : vector<1x256xf32>, i32 -> vector<1x256xf32>
    %c1_i32_33 = arith.constant 1 : i32
    %91 = tpu.dynamic_rotate %35 by %c1_i32_33 dim 1 : vector<1x256xf32>, i32 -> vector<1x256xf32>
    %92 = vector.broadcast %88 : f32 to vector<1x256xf32>
    %93 = arith.mulf %92, %90 : vector<1x256xf32>
    %94 = vector.broadcast %89 : f32 to vector<1x256xf32>
    %95 = arith.mulf %94, %91 : vector<1x256xf32>
    %96 = arith.addf %93, %95 : vector<1x256xf32>
    %c1_i32_34 = arith.constant 1 : i32
    %97 = vector.broadcast %c1_i32_34 : i32 to vector<1x256xi32>
    %98 = arith.cmpi sge, %38, %97 : vector<1x256xi32>
    %cst_35 = arith.constant 0.000000e+00 : f32
    %99 = vector.broadcast %cst_35 : f32 to vector<1x256xf32>
    %100 = arith.select %98, %96, %99 : vector<1x256xi1>, vector<1x256xf32>
    %101 = arith.addf %87, %100 : vector<1x256xf32>
    %c4 = arith.constant 4 : index
    %102 = memref.load %arg6[%c4] : memref<18xf32, #tpu.memory_space<smem>>
    %c13 = arith.constant 13 : index
    %103 = memref.load %arg6[%c13] : memref<18xf32, #tpu.memory_space<smem>>
    %104 = vector.broadcast %102 : f32 to vector<1x256xf32>
    %105 = arith.mulf %104, %33 : vector<1x256xf32>
    %106 = vector.broadcast %103 : f32 to vector<1x256xf32>
    %107 = arith.mulf %106, %35 : vector<1x256xf32>
    %108 = arith.addf %105, %107 : vector<1x256xf32>
    %109 = arith.addf %101, %108 : vector<1x256xf32>
    %c5 = arith.constant 5 : index
    %110 = memref.load %arg6[%c5] : memref<18xf32, #tpu.memory_space<smem>>
    %c14 = arith.constant 14 : index
    %111 = memref.load %arg6[%c14] : memref<18xf32, #tpu.memory_space<smem>>
    %c255_i32 = arith.constant 255 : i32
    %112 = tpu.dynamic_rotate %33 by %c255_i32 dim 1 : vector<1x256xf32>, i32 -> vector<1x256xf32>
    %c255_i32_36 = arith.constant 255 : i32
    %113 = tpu.dynamic_rotate %35 by %c255_i32_36 dim 1 : vector<1x256xf32>, i32 -> vector<1x256xf32>
    %114 = vector.broadcast %110 : f32 to vector<1x256xf32>
    %115 = arith.mulf %114, %112 : vector<1x256xf32>
    %116 = vector.broadcast %111 : f32 to vector<1x256xf32>
    %117 = arith.mulf %116, %113 : vector<1x256xf32>
    %118 = arith.addf %115, %117 : vector<1x256xf32>
    %c14_i32_37 = arith.constant 14 : i32
    %119 = vector.broadcast %c14_i32_37 : i32 to vector<1x256xi32>
    %120 = arith.cmpi sle, %38, %119 : vector<1x256xi32>
    %cst_38 = arith.constant 0.000000e+00 : f32
    %121 = vector.broadcast %cst_38 : f32 to vector<1x256xf32>
    %122 = arith.select %120, %118, %121 : vector<1x256xi1>, vector<1x256xf32>
    %123 = arith.addf %109, %122 : vector<1x256xf32>
    %c6 = arith.constant 6 : index
    %124 = memref.load %arg6[%c6] : memref<18xf32, #tpu.memory_space<smem>>
    %c15 = arith.constant 15 : index
    %125 = memref.load %arg6[%c15] : memref<18xf32, #tpu.memory_space<smem>>
    %c241_i32 = arith.constant 241 : i32
    %126 = tpu.dynamic_rotate %33 by %c241_i32 dim 1 : vector<1x256xf32>, i32 -> vector<1x256xf32>
    %c241_i32_39 = arith.constant 241 : i32
    %127 = tpu.dynamic_rotate %35 by %c241_i32_39 dim 1 : vector<1x256xf32>, i32 -> vector<1x256xf32>
    %128 = vector.broadcast %124 : f32 to vector<1x256xf32>
    %129 = arith.mulf %128, %126 : vector<1x256xf32>
    %130 = vector.broadcast %125 : f32 to vector<1x256xf32>
    %131 = arith.mulf %130, %127 : vector<1x256xf32>
    %132 = arith.addf %129, %131 : vector<1x256xf32>
    %c240_i32 = arith.constant 240 : i32
    %133 = vector.broadcast %c240_i32 : i32 to vector<1x256xi32>
    %134 = arith.cmpi slt, %36, %133 : vector<1x256xi32>
    %c1_i32_40 = arith.constant 1 : i32
    %135 = vector.broadcast %c1_i32_40 : i32 to vector<1x256xi32>
    %136 = arith.cmpi sge, %38, %135 : vector<1x256xi32>
    %137 = arith.andi %134, %136 : vector<1x256xi1>
    %cst_41 = arith.constant 0.000000e+00 : f32
    %138 = vector.broadcast %cst_41 : f32 to vector<1x256xf32>
    %139 = arith.select %137, %132, %138 : vector<1x256xi1>, vector<1x256xf32>
    %140 = arith.addf %123, %139 : vector<1x256xf32>
    %c7 = arith.constant 7 : index
    %141 = memref.load %arg6[%c7] : memref<18xf32, #tpu.memory_space<smem>>
    %c16 = arith.constant 16 : index
    %142 = memref.load %arg6[%c16] : memref<18xf32, #tpu.memory_space<smem>>
    %c240_i32_42 = arith.constant 240 : i32
    %143 = tpu.dynamic_rotate %33 by %c240_i32_42 dim 1 : vector<1x256xf32>, i32 -> vector<1x256xf32>
    %c240_i32_43 = arith.constant 240 : i32
    %144 = tpu.dynamic_rotate %35 by %c240_i32_43 dim 1 : vector<1x256xf32>, i32 -> vector<1x256xf32>
    %145 = vector.broadcast %141 : f32 to vector<1x256xf32>
    %146 = arith.mulf %145, %143 : vector<1x256xf32>
    %147 = vector.broadcast %142 : f32 to vector<1x256xf32>
    %148 = arith.mulf %147, %144 : vector<1x256xf32>
    %149 = arith.addf %146, %148 : vector<1x256xf32>
    %c240_i32_44 = arith.constant 240 : i32
    %150 = vector.broadcast %c240_i32_44 : i32 to vector<1x256xi32>
    %151 = arith.cmpi slt, %36, %150 : vector<1x256xi32>
    %cst_45 = arith.constant 0.000000e+00 : f32
    %152 = vector.broadcast %cst_45 : f32 to vector<1x256xf32>
    %153 = arith.select %151, %149, %152 : vector<1x256xi1>, vector<1x256xf32>
    %154 = arith.addf %140, %153 : vector<1x256xf32>
    %c8 = arith.constant 8 : index
    %155 = memref.load %arg6[%c8] : memref<18xf32, #tpu.memory_space<smem>>
    %c17 = arith.constant 17 : index
    %156 = memref.load %arg6[%c17] : memref<18xf32, #tpu.memory_space<smem>>
    %c239_i32 = arith.constant 239 : i32
    %157 = tpu.dynamic_rotate %33 by %c239_i32 dim 1 : vector<1x256xf32>, i32 -> vector<1x256xf32>
    %c239_i32_46 = arith.constant 239 : i32
    %158 = tpu.dynamic_rotate %35 by %c239_i32_46 dim 1 : vector<1x256xf32>, i32 -> vector<1x256xf32>
    %159 = vector.broadcast %155 : f32 to vector<1x256xf32>
    %160 = arith.mulf %159, %157 : vector<1x256xf32>
    %161 = vector.broadcast %156 : f32 to vector<1x256xf32>
    %162 = arith.mulf %161, %158 : vector<1x256xf32>
    %163 = arith.addf %160, %162 : vector<1x256xf32>
    %c240_i32_47 = arith.constant 240 : i32
    %164 = vector.broadcast %c240_i32_47 : i32 to vector<1x256xi32>
    %165 = arith.cmpi slt, %36, %164 : vector<1x256xi32>
    %c14_i32_48 = arith.constant 14 : i32
    %166 = vector.broadcast %c14_i32_48 : i32 to vector<1x256xi32>
    %167 = arith.cmpi sle, %38, %166 : vector<1x256xi32>
    %168 = arith.andi %165, %167 : vector<1x256xi1>
    %cst_49 = arith.constant 0.000000e+00 : f32
    %169 = vector.broadcast %cst_49 : f32 to vector<1x256xf32>
    %170 = arith.select %168, %163, %169 : vector<1x256xi1>, vector<1x256xf32>
    %171 = arith.addf %154, %170 : vector<1x256xf32>
    %c0_50 = arith.constant 0 : index
    %172 = memref.load %arg7[%c0_50] : memref<1xf32, #tpu.memory_space<smem>>
    %173 = vector.broadcast %172 : f32 to vector<1x256xf32>
    %174 = arith.addf %171, %173 : vector<1x256xf32>
    %cst_51 = arith.constant 0.000000e+00 : f32
    %175 = vector.broadcast %cst_51 : f32 to vector<1x256xf32>
    %176 = arith.subf %175, %174 : vector<1x256xf32>
    %177 = math.exp %176 : vector<1x256xf32>
    %cst_52 = arith.constant 1.000000e+00 : f32
    %178 = vector.broadcast %cst_52 : f32 to vector<1x256xf32>
    %179 = arith.addf %178, %177 : vector<1x256xf32>
    %cst_53 = arith.constant 1.000000e+00 : f32
    %180 = vector.broadcast %cst_53 : f32 to vector<1x256xf32>
    %181 = arith.divf %180, %179 : vector<1x256xf32>
    %182 = vector.broadcast %29 : vector<16x1xf32> to vector<16x256xf32>
    %183 = vector.broadcast %181 : vector<1x256xf32> to vector<16x256xf32>
    %184 = arith.addf %182, %183 : vector<16x256xf32>
    %185 = arith.mulf %1, %184 : vector<16x256xf32>
    %c0_54 = arith.constant 0 : index
    %c0_55 = arith.constant 0 : index
    %186 = vector.load %arg5[%c0_54, %c0_55] : memref<16x16xf32, #tpu.memory_space<vmem>>, vector<16x16xf32>
    %cst_56 = arith.constant dense<0.000000e+00> : vector<16x256xf32>
    %187 = tpu.matmul %186, %185, %cst_56 {dimension_numbers = #tpu.dot_dimension_numbers<[1], [0], [0], [1], [0, 0, 1, 1], [], []>, precision = #tpu.contract_precision<fp32>} : vector<16x16xf32>, vector<16x256xf32>, vector<16x256xf32> -> vector<16x256xf32>
    %188 = arith.addf %1, %187 : vector<16x256xf32>
    %c0_57 = arith.constant 0 : index
    %c0_58 = arith.constant 0 : index
    %c0_59 = arith.constant 0 : index
    %189 = vector.load %arg8[%c0_57, %c0_58, %c0_59] : memref<1x16x256xf32, #tpu.memory_space<vmem>>, vector<1x16x256xf32>
    %190 = vector.shape_cast %189 : vector<1x16x256xf32> to vector<16x256xf32>
    %191 = vector.shape_cast %188 : vector<16x256xf32> to vector<1x16x256xf32>
    tpu.vector_store %arg8[%c0_57, %c0_58, %c0_59], %191 {strides = array<i32>} : memref<1x16x256xf32, #tpu.memory_space<vmem>>, vector<1x16x256xf32>,
    return
  }
  func.func @transform_0(%arg0: i32) -> (i32, i32, i32) {
    %c0_i32 = arith.constant 0 : i32
    %c0_i32_0 = arith.constant 0 : i32
    %c0_i32_1 = arith.constant 0 : i32
    return %arg0, %c0_i32, %c0_i32_0 : i32, i32, i32
  }
  func.func @transform_1(%arg0: i32) -> (i32, i32) {
    %c0_i32 = arith.constant 0 : i32
    %c0_i32_0 = arith.constant 0 : i32
    %c0_i32_1 = arith.constant 0 : i32
    return %c0_i32, %c0_i32_0 : i32, i32
  }
  func.func @transform_2(%arg0: i32) -> (i32, i32) {
    %c0_i32 = arith.constant 0 : i32
    %c0_i32_0 = arith.constant 0 : i32
    %c0_i32_1 = arith.constant 0 : i32
    return %c0_i32, %c0_i32_0 : i32, i32
  }
  func.func @transform_3(%arg0: i32) -> (i32, i32) {
    %c0_i32 = arith.constant 0 : i32
    %c0_i32_0 = arith.constant 0 : i32
    %c0_i32_1 = arith.constant 0 : i32
    return %c0_i32, %c0_i32_0 : i32, i32
  }
  func.func @transform_4(%arg0: i32) -> (i32, i32) {
    %c0_i32 = arith.constant 0 : i32
    %c0_i32_0 = arith.constant 0 : i32
    %c0_i32_1 = arith.constant 0 : i32
    return %c0_i32, %c0_i32_0 : i32, i32
  }
  func.func @transform_5(%arg0: i32) -> i32 {
    %c0_i32 = arith.constant 0 : i32
    %c0_i32_0 = arith.constant 0 : i32
    return %c0_i32 : i32
  }
  func.func @transform_6(%arg0: i32) -> i32 {
    %c0_i32 = arith.constant 0 : i32
    %c0_i32_0 = arith.constant 0 : i32
    return %c0_i32 : i32
  }
  func.func @transform_7(%arg0: i32) -> (i32, i32, i32) {
    %c0_i32 = arith.constant 0 : i32
    %c0_i32_0 = arith.constant 0 : i32
    %c0_i32_1 = arith.constant 0 : i32
    return %arg0, %c0_i32, %c0_i32_0 : i32, i32, i32
  }
}

</mosaic_0001>

<llo_original>
// kernel: tpu_custom_call.1
$region0: #{tpu_custom_call.1}
  #allocation0 [shape = 'u32[]', space=smem, size = 0x4, offset = 0x4, fixed_abs, tag = 'smem constant byte address 0x4 - core index']
  #allocation1 [shape = 'u32[72,128]{1,0:T(1,128)}', space=vmem, size = 0x9000, scoped, tag = 'internal scratch']
  #allocation2 [shape = 'f32[1]{0:T(128)S(6)}', space=smem, size = 0x200, scoped, tag = 'scoped memory for tpu_custom_call.1']
  %s0 = inlined_call_operand.hbm [shape: f32[2,16,256], index: 0, kind: input, shape index: {}]
  %s1 = inlined_call_operand.vmem [shape: f32[16,4], index: 1, kind: input, shape index: {}]
  %s2 = inlined_call_operand.vmem [shape: f32[1,4], index: 2, kind: input, shape index: {}]
  %s3 = inlined_call_operand.vmem [shape: f32[16,4], index: 3, kind: input, shape index: {}]
  %s4 = inlined_call_operand.vmem [shape: f32[16,16], index: 4, kind: input, shape index: {}]
  %s5 = inlined_call_operand.vmem [shape: f32[18], index: 5, kind: input, shape index: {}]
  %s6 = inlined_call_operand.<no memory space> [shape: f32[1], index: 6, kind: input, shape index: {}]
  %s7 = inlined_call_operand.hbm [shape: f32[2,16,256], index: 7, kind: output, shape index: {}]
  %s8 = sld [smem:[#allocation0]]
  $region69: #{tpu_custom_call.1} parent=0
    _
  %s10 = ssub.s32 1, %s8
  %s11 = scalar_select 0, %s10, %s8
  %12 = sst [smem:[#allocation2]] %s6
  $region1: #{tpu_custom_call.1} parent=0
    #allocation3 [shape = 'u8[32768]{0}', space=vmem, size = 0x8000, scoped, tag = 'input window, operand 0']
    #allocation4 [shape = 's32[2]{0}', space=sflag, size = 0x8, scoped, tag = 'scoped memory for tpu_custom_call.1']
    #allocation5 [shape = 's32[2]{0}', space=sflag, size = 0x8, scoped, tag = 'scoped memory for tpu_custom_call.1']
    #allocation6 [shape = 's32[2]{0}', space=sflag, size = 0x8, scoped, tag = 'scoped memory for tpu_custom_call.1']
    #allocation7 [shape = 'u8[512]{0}', space=smem, size = 0x200, scoped, tag = 'input window, operand 5, single buffered']
    #allocation8 [shape = 'u8[32768]{0}', space=vmem, size = 0x8000, scoped, tag = 'output window, operand 0']
    %13 = vsyncpa [#allocation4], 0
    %s14 = scalar_lea.sflag [#allocation4], 1
    %15 = vsyncpa %s14, 0
    %16 = vsyncpa [#allocation6], 0
    %17 = vsyncpa [#allocation5], 0
    %s18 = scalar_lea.sflag [#allocation5], 1
    %19 = vsyncpa %s18, 0
    loop: start=0, step=1, limit=4
    $region2: #{tpu_custom_call.1} parent=1 // loop_pre_header
      _
    $region3: #{tpu_custom_call.1} parent=1 // loop_header
      %s21 = sphi 0, %s25
      %p22 = scmp.ge.s32.totalorder %s21, 4
      %s31 = sphi 0, %s33
      %s34 = sphi 0, %s31
      %s35 = sphi 0, %s34
      %s51 = sphi 0, %s35
      %s55 = sphi 0, %s55
      %s57 = sphi 0, %s55
      %s58 = sphi 0, %s57
      %s72 = sphi 0, %s58
      %s76 = sphi 0, %s76
      %s78 = sphi 0, %s76
      %s79 = sphi 0, %s78
      %s93 = sphi 0, %s79
      %s97 = sphi 0, %s97
      %s99 = sphi 0, %s97
      %s100 = sphi 0, %s99
      %s114 = sphi 0, %s100
      %s118 = sphi 0, %s118
      %s120 = sphi 0, %s118
      %s121 = sphi 0, %s120
      %s135 = sphi 0, %s121
      %s139 = sphi 0, %s139
      %s141 = sphi 0, %s139
      %s142 = sphi 0, %s141
      %s156 = sphi 0, %s142
      %s160 = sphi 0, %s160
      %s162 = sphi 0, %s160
      %s163 = sphi 0, %s162
      %s177 = sphi 0, %s163
      %s183 = sphi 0, %s185
      %s186 = sphi 0, %s183
      %s187 = sphi 0, %s186
      %s203 = sphi 0, %s187
    $region4: #{tpu_custom_call.1} parent=1 // loop_header_branch
      %24 = sbr.rel (%p22) target = $region8
    $region5: #{tpu_custom_call.1} parent=1 // loop_body
      %s26 = ssub.s32 %s21, 1
      %s27 = ssub.s32 %s21, 2
      %s28 = sadd.s32 %s21, 1
      %s29 = ssub.s32 %s21, %s28
      %p30 = scmp.eq.s32.totalorder %s29, 0
      %s32 = sadd.s32 %s31, 1
      %s33 = scalar_select %p30, %s31, %s32
      %p36 = pneg %p30
      %p37 = scmp.eq.s32.totalorder %s21, 1
      %p38 = por %p36, %p37
      %p39 = scmp.ne.s32.totalorder %s31, %s34
      %p40 = scmp.eq.s32.totalorder %s21, 0
      %p41 = por %p39, %p40
      %p42 = scmp.ne.s32.totalorder %s31, %s34
      %p43 = scmp.eq.s32.totalorder %s26, 1
      %p44 = por %p42, %p43
      %p45 = scmp.ne.s32.totalorder %s34, %s35
      %p46 = scmp.eq.s32.totalorder %s26, 0
      %p47 = por %p45, %p46
      %p48 = scmp.ne.s32.totalorder %s34, %s35
      %p49 = scmp.eq.s32.totalorder %s27, 1
      %p50 = por %p48, %p49
      %p52 = scmp.ne.s32.totalorder %s35, %s51
      %p53 = scmp.eq.s32.totalorder %s27, 0
      %p54 = por %p52, %p53
      %s56 = sadd.s32 %s55, 1
      %p59 = scmp.eq.s32.totalorder %s21, 1
      %p60 = scmp.ne.s32.totalorder %s55, %s57
      %p61 = scmp.eq.s32.totalorder %s21, 0
      %p62 = por %p60, %p61
      %p63 = scmp.ne.s32.totalorder %s55, %s57
      %p64 = scmp.eq.s32.totalorder %s26, 1
      %p65 = por %p63, %p64
      %p66 = scmp.ne.s32.totalorder %s57, %s58
      %p67 = scmp.eq.s32.totalorder %s26, 0
      %p68 = por %p66, %p67
      %p69 = scmp.ne.s32.totalorder %s57, %s58
      %p70 = scmp.eq.s32.totalorder %s27, 1
      %p71 = por %p69, %p70
      %p73 = scmp.ne.s32.totalorder %s58, %s72
      %p74 = scmp.eq.s32.totalorder %s27, 0
      %p75 = por %p73, %p74
      %s77 = sadd.s32 %s76, 1
      %p80 = scmp.eq.s32.totalorder %s21, 1
      %p81 = scmp.ne.s32.totalorder %s76, %s78
      %p82 = scmp.eq.s32.totalorder %s21, 0
      %p83 = por %p81, %p82
      %p84 = scmp.ne.s32.totalorder %s76, %s78
      %p85 = scmp.eq.s32.totalorder %s26, 1
      %p86 = por %p84, %p85
      %p87 = scmp.ne.s32.totalorder %s78, %s79
      %p88 = scmp.eq.s32.totalorder %s26, 0
      %p89 = por %p87, %p88
      %p90 = scmp.ne.s32.totalorder %s78, %s79
      %p91 = scmp.eq.s32.totalorder %s27, 1
      %p92 = por %p90, %p91
      %p94 = scmp.ne.s32.totalorder %s79, %s93
      %p95 = scmp.eq.s32.totalorder %s27, 0
      %p96 = por %p94, %p95
      %s98 = sadd.s32 %s97, 1
      %p101 = scmp.eq.s32.totalorder %s21, 1
      %p102 = scmp.ne.s32.totalorder %s97, %s99
      %p103 = scmp.eq.s32.totalorder %s21, 0
      %p104 = por %p102, %p103
      %p105 = scmp.ne.s32.totalorder %s97, %s99
      %p106 = scmp.eq.s32.totalorder %s26, 1
      %p107 = por %p105, %p106
      %p108 = scmp.ne.s32.totalorder %s99, %s100
      %p109 = scmp.eq.s32.totalorder %s26, 0
      %p110 = por %p108, %p109
      %p111 = scmp.ne.s32.totalorder %s99, %s100
      %p112 = scmp.eq.s32.totalorder %s27, 1
      %p113 = por %p111, %p112
      %p115 = scmp.ne.s32.totalorder %s100, %s114
      %p116 = scmp.eq.s32.totalorder %s27, 0
      %p117 = por %p115, %p116
      %s119 = sadd.s32 %s118, 1
      %p122 = scmp.eq.s32.totalorder %s21, 1
      %p123 = scmp.ne.s32.totalorder %s118, %s120
      %p124 = scmp.eq.s32.totalorder %s21, 0
      %p125 = por %p123, %p124
      %p126 = scmp.ne.s32.totalorder %s118, %s120
      %p127 = scmp.eq.s32.totalorder %s26, 1
      %p128 = por %p126, %p127
      %p129 = scmp.ne.s32.totalorder %s120, %s121
      %p130 = scmp.eq.s32.totalorder %s26, 0
      %p131 = por %p129, %p130
      %p132 = scmp.ne.s32.totalorder %s120, %s121
      %p133 = scmp.eq.s32.totalorder %s27, 1
      %p134 = por %p132, %p133
      %p136 = scmp.ne.s32.totalorder %s121, %s135
      %p137 = scmp.eq.s32.totalorder %s27, 0
      %p138 = por %p136, %p137
      %s140 = sadd.s32 %s139, 1
      %p143 = scmp.eq.s32.totalorder %s21, 1
      %p144 = scmp.ne.s32.totalorder %s139, %s141
      %p145 = scmp.eq.s32.totalorder %s21, 0
      %p146 = por %p144, %p145
      %p147 = scmp.ne.s32.totalorder %s139, %s141
      %p148 = scmp.eq.s32.totalorder %s26, 1
      %p149 = por %p147, %p148
      %p150 = scmp.ne.s32.totalorder %s141, %s142
      %p151 = scmp.eq.s32.totalorder %s26, 0
      %p152 = por %p150, %p151
      %p153 = scmp.ne.s32.totalorder %s141, %s142
      %p154 = scmp.eq.s32.totalorder %s27, 1
      %p155 = por %p153, %p154
      %p157 = scmp.ne.s32.totalorder %s142, %s156
      %p158 = scmp.eq.s32.totalorder %s27, 0
      %p159 = por %p157, %p158
      %s161 = sadd.s32 %s160, 1
      %p164 = scmp.eq.s32.totalorder %s21, 1
      %p165 = scmp.ne.s32.totalorder %s160, %s162
      %p166 = scmp.eq.s32.totalorder %s21, 0
      %p167 = por %p165, %p166
      %p168 = scmp.ne.s32.totalorder %s160, %s162
      %p169 = scmp.eq.s32.totalorder %s26, 1
      %p170 = por %p168, %p169
      %p171 = scmp.ne.s32.totalorder %s162, %s163
      %p172 = scmp.eq.s32.totalorder %s26, 0
      %p173 = por %p171, %p172
      %p174 = scmp.ne.s32.totalorder %s162, %s163
      %p175 = scmp.eq.s32.totalorder %s27, 1
      %p176 = por %p174, %p175
      %p178 = scmp.ne.s32.totalorder %s163, %s177
      %p179 = scmp.eq.s32.totalorder %s27, 0
      %p180 = por %p178, %p179
      %s181 = ssub.s32 %s21, %s28
      %p182 = scmp.eq.s32.totalorder %s181, 0
      %s184 = sadd.s32 %s183, 1
      %s185 = scalar_select %p182, %s183, %s184
      %p188 = pneg %p182
      %p189 = scmp.eq.s32.totalorder %s21, 1
      %p190 = por %p188, %p189
      %p191 = scmp.ne.s32.totalorder %s183, %s186
      %p192 = scmp.eq.s32.totalorder %s21, 0
      %p193 = por %p191, %p192
      %p194 = scmp.ne.s32.totalorder %s183, %s186
      %p195 = scmp.eq.s32.totalorder %s26, 1
      %p196 = por %p194, %p195
      %p197 = scmp.ne.s32.totalorder %s186, %s187
      %p198 = scmp.eq.s32.totalorder %s26, 0
      %p199 = por %p197, %p198
      %p200 = scmp.ne.s32.totalorder %s186, %s187
      %p201 = scmp.eq.s32.totalorder %s27, 1
      %p202 = por %p200, %p201
      %p204 = scmp.ne.s32.totalorder %s187, %s203
      %p205 = scmp.eq.s32.totalorder %s27, 0
      %p206 = por %p204, %p205
      %p207 = scmp.le.s32.totalorder 1, %s21
      %p208 = scmp.lt.s32.totalorder %s21, 3
      %p209 = pnand %p207, %p208
      %p210 = pneg %p209
      // Predicated region
      $region9: #{tpu_custom_call.1} parent=5 // pred_check
        _
      $region10: #{tpu_custom_call.1} parent=5 // pred_check_branch
        %212 = sbr.rel (%p209) target = $region12
      $region11: #{tpu_custom_call.1} parent=5 // pred_region
        %s213 = ssub.s32 %s21, 1
        // Predicated region
        $region13: #{tpu_custom_call.1} parent=11 // pred_check
          %p214 = pneg %p68
        $region14: #{tpu_custom_call.1} parent=11 // pred_check_branch
          %216 = sbr.rel (%p214) target = $region16
        $region15: #{tpu_custom_call.1} parent=11 // pred_region
          _
        $region16: #{tpu_custom_call.1} parent=11 // pred_fallthru
          _
        // Predicated region
        $region17: #{tpu_custom_call.1} parent=11 // pred_check
          %p217 = pneg %p89
        $region18: #{tpu_custom_call.1} parent=11 // pred_check_branch
          %219 = sbr.rel (%p217) target = $region20
        $region19: #{tpu_custom_call.1} parent=11 // pred_region
          _
        $region20: #{tpu_custom_call.1} parent=11 // pred_fallthru
          _
        // Predicated region
        $region21: #{tpu_custom_call.1} parent=11 // pred_check
          %p220 = pneg %p110
        $region22: #{tpu_custom_call.1} parent=11 // pred_check_branch
          %222 = sbr.rel (%p220) target = $region24
        $region23: #{tpu_custom_call.1} parent=11 // pred_region
          _
        $region24: #{tpu_custom_call.1} parent=11 // pred_fallthru
          _
        // Predicated region
        $region25: #{tpu_custom_call.1} parent=11 // pred_check
          %p223 = pneg %p131
        $region26: #{tpu_custom_call.1} parent=11 // pred_check_branch
          %225 = sbr.rel (%p223) target = $region28
        $region27: #{tpu_custom_call.1} parent=11 // pred_region
          _
        $region28: #{tpu_custom_call.1} parent=11 // pred_fallthru
          _
        // Predicated region
        $region29: #{tpu_custom_call.1} parent=11 // pred_check
          %p226 = pneg %p152
        $region30: #{tpu_custom_call.1} parent=11 // pred_check_branch
          %228 = sbr.rel (%p226) target = $region32
        $region31: #{tpu_custom_call.1} parent=11 // pred_region
          %230 = vsyncadd [#allocation6], 0
          %s232 = sshll.u32 %s5, 4
          %s233 = int_to_ptr.vmem [resolvable:$true] %s232
          %235 = dma.vmem_to_smem %s233, 16, [#allocation7], [#allocation6]
        $region32: #{tpu_custom_call.1} parent=11 // pred_fallthru
          _
        // Predicated region
        $region33: #{tpu_custom_call.1} parent=11 // pred_check
          %p236 = pneg %p173
        $region34: #{tpu_custom_call.1} parent=11 // pred_check_branch
          %238 = sbr.rel (%p236) target = $region36
        $region35: #{tpu_custom_call.1} parent=11 // pred_region
          _
        $region36: #{tpu_custom_call.1} parent=11 // pred_fallthru
          _
      $region12: #{tpu_custom_call.1} parent=5 // pred_fallthru
        _
      %p239 = scmp.lt.s32.totalorder %s21, 2
      // Predicated region
      $region37: #{tpu_custom_call.1} parent=5 // pred_check
        %p240 = pneg %p239
      $region38: #{tpu_custom_call.1} parent=5 // pred_check_branch
        %242 = sbr.rel (%p240) target = $region40
      $region39: #{tpu_custom_call.1} parent=5 // pred_region
        // Predicated region
        $region41: #{tpu_custom_call.1} parent=39 // pred_check
          %p243 = pneg %p41
        $region42: #{tpu_custom_call.1} parent=39 // pred_check_branch
          %245 = sbr.rel (%p243) target = $region44
        $region43: #{tpu_custom_call.1} parent=39 // pred_region
          %s246 = sand.u32 %s31, 1
          %s247 = scalar_lea.sflag [#allocation4], %s246
          %s248 = sand.u32 %s31, 1
          %s249 = smul.addr %s248, 32
          %s250 = scalar_lea.vmem [#allocation3], %s249
          %252 = vsyncadd %s247, 0
          %s253 = smul.addr %s21, 4
          %s254 = smul.addr %s253, 8
          %s255 = scalar_lea.hbm %s0, %s254
          %s256 = sshll.u32 %s255, 4
          %s257 = int_to_ptr.hbm [resolvable:$true] %s256
          %s258 = sshll.u32 %s250, 4
          %s259 = int_to_ptr.vmem [resolvable:$true] %s258
          %264 = dma.hbm_to_vmem [thread:$0]  %s257, 512, %s259, %s247, 256, 256, 16
        $region44: #{tpu_custom_call.1} parent=39 // pred_fallthru
          _
      $region40: #{tpu_custom_call.1} parent=5 // pred_fallthru
        _
      %p265 = scmp.le.s32.totalorder 1, %s21
      %p266 = scmp.lt.s32.totalorder %s21, 3
      %p267 = pnand %p265, %p266
      %p268 = pneg %p267
      // Predicated region
      $region45: #{tpu_custom_call.1} parent=5 // pred_check
        _
      $region46: #{tpu_custom_call.1} parent=5 // pred_check_branch
        %270 = sbr.rel (%p267) target = $region48
      $region47: #{tpu_custom_call.1} parent=5 // pred_region
        %s271 = ssub.s32 %s21, 1
        %s272 = sand.u32 %s34, 1
        %s273 = scalar_lea.sflag [#allocation4], %s272
        %s274 = sand.u32 %s34, 1
        %s275 = smul.addr %s274, 32
        %s276 = scalar_lea.vmem [#allocation3], %s275
        // Predicated region
        $region49: #{tpu_custom_call.1} parent=47 // pred_check
          %p277 = pneg %p47
        $region50: #{tpu_custom_call.1} parent=47 // pred_check_branch
          %279 = sbr.rel (%p277) target = $region52
        $region51: #{tpu_custom_call.1} parent=47 // pred_region
          %281 = dma.done %s273, 512
        $region52: #{tpu_custom_call.1} parent=47 // pred_fallthru
          _
        // Predicated region
        $region53: #{tpu_custom_call.1} parent=47 // pred_check
          %p282 = pneg %p152
        $region54: #{tpu_custom_call.1} parent=47 // pred_check_branch
          %284 = sbr.rel (%p282) target = $region56
        $region55: #{tpu_custom_call.1} parent=47 // pred_region
          %286 = dma.done [#allocation6], 16
        $region56: #{tpu_custom_call.1} parent=47 // pred_fallthru
          _
        %287 = sfence
        %s288 = sand.u32 %s34, 1
        %s289 = scalar_lea.sflag [#allocation4], %s288
        %s290 = sand.u32 %s34, 1
        %s291 = smul.addr %s290, 32
        %s292 = scalar_lea.vmem [#allocation3], %s291
        %p293 = pneg %p47
        %p294 = pneg %p44
        %p295 = pneg %p68
        %p296 = pneg %p65
        %p297 = pneg %p89
        %p298 = pneg %p86
        %p299 = pneg %p110
        %p300 = pneg %p107
        %p301 = pneg %p131
        %p302 = pneg %p128
        %p303 = pneg %p152
        %p304 = pneg %p149
        %p305 = pneg %p173
        %p306 = pneg %p170
        %p307 = pneg %p199
        %p308 = pneg %p196
        %s309 = sand.u32 %s186, 1
        %s310 = scalar_lea.sflag [#allocation5], %s309
        %s311 = sand.u32 %s186, 1
        %s312 = smul.addr %s311, 32
        %s313 = scalar_lea.vmem [#allocation8], %s312
        %v314 = vld [vmem:[%s276] sm:$0xff]
        %v315 = vld [vmem:[%s276 + $0x8] sm:$0xff]
        %v316 = vld [vmem:[%s276 + $0x10] sm:$0xff]
        %v317 = vld [vmem:[%s276 + $0x18] sm:$0xff]
        %v318 = vadd.f32 %v314, %v315
        %319 = vadd.xlane.f32.xlu0 %v318
        %v320 = vpop.xlane.xlu0 %319
        %v321 = vadd.f32 %v316, %v317
        %322 = vadd.xlane.f32.xlu0 %v321
        %v323 = vpop.xlane.xlu0 %322
        %v324 = vrcp.pop 256.0
        %v325 = vmul.f32 256.0, %v324
        %v326 = vsub.f32 1.0, %v325
        %v327 = vmul.f32 %v324, %v326
        %v328 = vadd.f32 %v324, %v327
        %vm329 = vweird.f32 %v324
        %v330 = vsel %vm329, %v324, %v328
        %v331 = vmul.f32 %v320, %v330
        %v332 = vmul.f32 %v323, %v330
        %v333 = vld [vmem:[%s1] sm:$0xff]
        %v334 = vld [vmem:[%s1 + $0x8] sm:$0xff]
        %v335 = vmul.f32 %v333, %v331
        %v336 = vmul.f32 %v334, %v332
        %vm337 = vcmask 31744
        %v338 = vsel %vm337, %v335, 0.0
        %v339 = vsel %vm337, %v336, 0.0
        %v340 = vadd.f32 %v338, %v339
        %v341 = vrot.slane %v340, 4
        %v342 = vadd.f32 %v340, %v341
        %v343 = vrot.slane %v342, 2
        %v344 = vadd.f32 %v342, %v343
        %v345 = vrot.slane %v344, 1
        %v346 = vadd.f32 %v344, %v345
        %v347 = vld [vmem:[%s2] sm:$0x1]
        %v348 = vadd.f32 %v346, %v347
        %vm349 = vcmp.gt.f32.partialorder %v348, 1.0
        %v350 = vsel %vm349, 1.0, 0.0
        %v351 = vld [vmem:[%s3] sm:$0xff]
        %v352 = vld [vmem:[%s3 + $0x8] sm:$0xff]
        %v353 = vperm.slane %v350, 0
        %v354 = vmul.f32 %v351, %v353
        %v355 = vmul.f32 %v352, %v353
        %v356 = vsel %vm337, %v354, 0.0
        %357 = vadd.xlane.f32.xlu0 %v356
        %v358 = vpop.xlane.xlu0 %357
        %v359 = vsel %vm337, %v355, 0.0
        %360 = vadd.xlane.f32.xlu0 %v359
        %v361 = vpop.xlane.xlu0 %360
        %v362 = vsub.f32 0.0, %v358
        %v363 = vsub.f32 0.0, %v361
        %v364 = vmul.f32 %v362, 1.442695
        %v365 = vpow.pop %v364
        %v366 = vmul.f32 %v363, 1.442695
        %v367 = vpow.pop %v366
        %v368 = vadd.f32 %v365, 1.0
        %v369 = vadd.f32 %v367, 1.0
        %v370 = vrcp.pop %v368
        %v371 = vmul.f32 %v368, %v370
        %v372 = vsub.f32 1.0, %v371
        %v373 = vmul.f32 %v370, %v372
        %v374 = vadd.f32 %v370, %v373
        %vm375 = vweird.f32 %v368
        %vm376 = vweird.f32 %v370
        %vm377 = vmor %vm375, %vm376
        %v378 = vsel %vm377, %v370, %v374
        %v379 = vand.u32 2147483647, %v368
        %vm380 = vcmp.eq.f32.partialorder %v379, 8.507059e+37
        %v381 = vand.u32 %v368, 2147483648
        %v382 = vor.u32 1.1754944e-38, %v381
        %v383 = vsel %vm380, %v382, %v378
        %v384 = vmul.f32 1.0, %v383
        %v385 = vrcp.pop %v369
        %v386 = vmul.f32 %v369, %v385
        %v387 = vsub.f32 1.0, %v386
        %v388 = vmul.f32 %v385, %v387
        %v389 = vadd.f32 %v385, %v388
        %vm390 = vweird.f32 %v369
        %vm391 = vweird.f32 %v385
        %vm392 = vmor %vm390, %vm391
        %v393 = vsel %vm392, %v385, %v389
        %v394 = vand.u32 2147483647, %v369
        %vm395 = vcmp.eq.f32.partialorder %v394, 8.507059e+37
        %v396 = vand.u32 %v369, 2147483648
        %v397 = vor.u32 1.1754944e-38, %v396
        %v398 = vsel %vm395, %v397, %v393
        %v399 = vmul.f32 1.0, %v398
        %v400 = vadd.f32 %v314, %v316
        %v401 = vrot.slane %v400, 4
        %v402 = vadd.f32 %v400, %v401
        %v403 = vrot.slane %v402, 2
        %v404 = vadd.f32 %v402, %v403
        %v405 = vrot.slane %v404, 1
        %v406 = vadd.f32 %v404, %v405
        %v407 = vadd.f32 %v315, %v317
        %v408 = vrot.slane %v407, 4
        %v409 = vadd.f32 %v407, %v408
        %v410 = vrot.slane %v409, 2
        %v411 = vadd.f32 %v409, %v410
        %v412 = vrot.slane %v411, 1
        %v413 = vadd.f32 %v411, %v412
        %v414 = vrcp.pop 16.0
        %v415 = vmul.f32 16.0, %v414
        %v416 = vsub.f32 1.0, %v415
        %v417 = vmul.f32 %v414, %v416
        %v418 = vadd.f32 %v414, %v417
        %vm419 = vweird.f32 %v414
        %v420 = vsel %vm419, %v414, %v418
        %v421 = vmul.f32 %v406, %v420
        %v422 = vmul.f32 %v413, %v420
        %v423 = vmax.f32 %v314, %v316
        %v424 = vrot.slane %v423, 4
        %v425 = vmax.f32 %v423, %v424
        %v426 = vrot.slane %v425, 2
        %v427 = vmax.f32 %v425, %v426
        %v428 = vrot.slane %v427, 1
        %v429 = vmax.f32 %v427, %v428
        %v430 = vmax.f32 %v315, %v317
        %v431 = vrot.slane %v430, 4
        %v432 = vmax.f32 %v430, %v431
        %v433 = vrot.slane %v432, 2
        %v434 = vmax.f32 %v432, %v433
        %v435 = vrot.slane %v434, 1
        %v436 = vmax.f32 %v434, %v435
        %v437 = vlaneseq
        %v438 = vand.u32 %v437, 127
        %v439 = vadd.s32 %v438, 128
        %v440 = vand.u32 %v438, 15
        %v441 = vand.u32 %v439, 15
        %s442 = sld [smem:[#allocation7]]
        %s443 = sld [smem:[#allocation7 + $0x9]]
        %444 = vrot.lane.b32.xlu0 %v421, 17
        %v445 = vpop.permute.xlu0 %444
        %446 = vrot.lane.b32.xlu0 %v422, 17
        %v447 = vpop.permute.xlu0 %446
        %vm448 = vcmp.lt.s32.totalorder %v438, 17
        %v449 = vsel %vm448, %v445, %v447
        %v450 = vsel %vm448, %v447, %v445
        %451 = vrot.lane.b32.xlu0 %v429, 17
        %v452 = vpop.permute.xlu0 %451
        %453 = vrot.lane.b32.xlu0 %v436, 17
        %v454 = vpop.permute.xlu0 %453
        %v455 = vsel %vm448, %v452, %v454
        %v456 = vsel %vm448, %v454, %v452
        %v457 = vstv %s442
        %v458 = vmul.f32 %v457, %v450
        %v459 = vmul.f32 %v457, %v449
        %v460 = vstv %s443
        %v461 = vmul.f32 %v460, %v456
        %v462 = vmul.f32 %v460, %v455
        %v463 = vadd.f32 %v458, %v461
        %v464 = vadd.f32 %v459, %v462
        %vm465 = vcmp.ge.s32.totalorder %v438, 16
        %vm466 = vcmp.ge.s32.totalorder %v439, 16
        %vm467 = vcmp.ge.s32.totalorder %v440, 1
        %vm468 = vcmp.ge.s32.totalorder %v441, 1
        %vm469 = vmand %vm465, %vm467
        %vm470 = vmand %vm466, %vm468
        %v471 = vsel %vm469, %v463, 0.0
        %v472 = vsel %vm470, %v464, 0.0
        %v473 = vadd.f32 %v471, 0.0
        %v474 = vadd.f32 %v472, 0.0
        %s475 = sld [smem:[#allocation7 + $0x1]]
        %s476 = sld [smem:[#allocation7 + $0xa]]
        %477 = vrot.lane.b32.xlu0 %v421, 16
        %v478 = vpop.permute.xlu0 %477
        %479 = vrot.lane.b32.xlu0 %v422, 16
        %v480 = vpop.permute.xlu0 %479
        %vm481 = vcmp.lt.s32.totalorder %v438, 16
        %v482 = vsel %vm481, %v478, %v480
        %v483 = vsel %vm481, %v480, %v478
        %484 = vrot.lane.b32.xlu0 %v429, 16
        %v485 = vpop.permute.xlu0 %484
        %486 = vrot.lane.b32.xlu0 %v436, 16
        %v487 = vpop.permute.xlu0 %486
        %v488 = vsel %vm481, %v485, %v487
        %v489 = vsel %vm481, %v487, %v485
        %v490 = vstv %s475
        %v491 = vmul.f32 %v490, %v483
        %v492 = vmul.f32 %v490, %v482
        %v493 = vstv %s476
        %v494 = vmul.f32 %v493, %v489
        %v495 = vmul.f32 %v493, %v488
        %v496 = vadd.f32 %v491, %v494
        %v497 = vadd.f32 %v492, %v495
        %v498 = vsel %vm465, %v496, 0.0
        %v499 = vsel %vm466, %v497, 0.0
        %v500 = vadd.f32 %v473, %v498
        %v501 = vadd.f32 %v474, %v499
        %s502 = sld [smem:[#allocation7 + $0x2]]
        %s503 = sld [smem:[#allocation7 + $0xb]]
        %504 = vrot.lane.b32.xlu0 %v421, 15
        %v505 = vpop.permute.xlu0 %504
        %506 = vrot.lane.b32.xlu0 %v422, 15
        %v507 = vpop.permute.xlu0 %506
        %vm508 = vcmp.lt.s32.totalorder %v438, 15
        %v509 = vsel %vm508, %v505, %v507
        %v510 = vsel %vm508, %v507, %v505
        %511 = vrot.lane.b32.xlu0 %v429, 15
        %v512 = vpop.permute.xlu0 %511
        %513 = vrot.lane.b32.xlu0 %v436, 15
        %v514 = vpop.permute.xlu0 %513
        %v515 = vsel %vm508, %v512, %v514
        %v516 = vsel %vm508, %v514, %v512
        %v517 = vstv %s502
        %v518 = vmul.f32 %v517, %v510
        %v519 = vmul.f32 %v517, %v509
        %v520 = vstv %s503
        %v521 = vmul.f32 %v520, %v516
        %v522 = vmul.f32 %v520, %v515
        %v523 = vadd.f32 %v518, %v521
        %v524 = vadd.f32 %v519, %v522
        %vm525 = vcmp.le.s32.totalorder %v440, 14
        %vm526 = vcmp.le.s32.totalorder %v441, 14
        %vm527 = vmand %vm465, %vm525
        %vm528 = vmand %vm466, %vm526
        %v529 = vsel %vm527, %v523, 0.0
        %v530 = vsel %vm528, %v524, 0.0
        %v531 = vadd.f32 %v500, %v529
        %v532 = vadd.f32 %v501, %v530
        %s533 = sld [smem:[#allocation7 + $0x3]]
        %s534 = sld [smem:[#allocation7 + $0xc]]
        %535 = vrot.lane.b32.xlu0 %v421, 1
        %v536 = vpop.permute.xlu0 %535
        %537 = vrot.lane.b32.xlu0 %v422, 1
        %v538 = vpop.permute.xlu0 %537
        %vm539 = vcmp.lt.s32.totalorder %v438, 1
        %v540 = vsel %vm539, %v536, %v538
        %v541 = vsel %vm539, %v538, %v536
        %542 = vrot.lane.b32.xlu0 %v429, 1
        %v543 = vpop.permute.xlu0 %542
        %544 = vrot.lane.b32.xlu0 %v436, 1
        %v545 = vpop.permute.xlu0 %544
        %v546 = vsel %vm539, %v543, %v545
        %v547 = vsel %vm539, %v545, %v543
        %v548 = vstv %s533
        %v549 = vmul.f32 %v548, %v541
        %v550 = vmul.f32 %v548, %v540
        %v551 = vstv %s534
        %v552 = vmul.f32 %v551, %v547
        %v553 = vmul.f32 %v551, %v546
        %v554 = vadd.f32 %v549, %v552
        %v555 = vadd.f32 %v550, %v553
        %v556 = vsel %vm467, %v554, 0.0
        %v557 = vsel %vm468, %v555, 0.0
        %v558 = vadd.f32 %v531, %v556
        %v559 = vadd.f32 %v532, %v557
        %s560 = sld [smem:[#allocation7 + $0x4]]
        %s561 = sld [smem:[#allocation7 + $0xd]]
        %v562 = vstv %s560
        %v563 = vmul.f32 %v562, %v421
        %v564 = vmul.f32 %v562, %v422
        %v565 = vstv %s561
        %v566 = vmul.f32 %v565, %v429
        %v567 = vmul.f32 %v565, %v436
        %v568 = vadd.f32 %v563, %v566
        %v569 = vadd.f32 %v564, %v567
        %v570 = vadd.f32 %v558, %v568
        %v571 = vadd.f32 %v559, %v569
        %s572 = sld [smem:[#allocation7 + $0x5]]
        %s573 = sld [smem:[#allocation7 + $0xe]]
        %574 = vrot.lane.b32.xlu0 %v421, 127
        %v575 = vpop.permute.xlu0 %574
        %576 = vrot.lane.b32.xlu0 %v422, 127
        %v577 = vpop.permute.xlu0 %576
        %vm578 = vcmp.lt.s32.totalorder %v438, 127
        %v579 = vsel %vm578, %v575, %v577
        %v580 = vsel %vm578, %v577, %v575
        %581 = vrot.lane.b32.xlu0 %v429, 127
        %v582 = vpop.permute.xlu0 %581
        %583 = vrot.lane.b32.xlu0 %v436, 127
        %v584 = vpop.permute.xlu0 %583
        %v585 = vsel %vm578, %v582, %v584
        %v586 = vsel %vm578, %v584, %v582
        %v587 = vstv %s572
        %v588 = vmul.f32 %v587, %v579
        %v589 = vmul.f32 %v587, %v580
        %v590 = vstv %s573
        %v591 = vmul.f32 %v590, %v585
        %v592 = vmul.f32 %v590, %v586
        %v593 = vadd.f32 %v588, %v591
        %v594 = vadd.f32 %v589, %v592
        %v595 = vsel %vm525, %v593, 0.0
        %v596 = vsel %vm526, %v594, 0.0
        %v597 = vadd.f32 %v570, %v595
        %v598 = vadd.f32 %v571, %v596
        %s599 = sld [smem:[#allocation7 + $0x6]]
        %s600 = sld [smem:[#allocation7 + $0xf]]
        %601 = vrot.lane.b32.xlu0 %v421, 113
        %v602 = vpop.permute.xlu0 %601
        %603 = vrot.lane.b32.xlu0 %v422, 113
        %v604 = vpop.permute.xlu0 %603
        %vm605 = vcmp.lt.s32.totalorder %v438, 113
        %v606 = vsel %vm605, %v602, %v604
        %v607 = vsel %vm605, %v604, %v602
        %608 = vrot.lane.b32.xlu0 %v429, 113
        %v609 = vpop.permute.xlu0 %608
        %610 = vrot.lane.b32.xlu0 %v436, 113
        %v611 = vpop.permute.xlu0 %610
        %v612 = vsel %vm605, %v609, %v611
        %v613 = vsel %vm605, %v611, %v609
        %v614 = vstv %s599
        %v615 = vmul.f32 %v614, %v606
        %v616 = vmul.f32 %v614, %v607
        %v617 = vstv %s600
        %v618 = vmul.f32 %v617, %v612
        %v619 = vmul.f32 %v617, %v613
        %v620 = vadd.f32 %v615, %v618
        %v621 = vadd.f32 %v616, %v619
        %vm622 = vcmp.lt.s32.totalorder %v438, 240
        %vm623 = vcmp.lt.s32.totalorder %v439, 240
        %vm624 = vmand %vm622, %vm467
        %vm625 = vmand %vm623, %vm468
        %v626 = vsel %vm624, %v620, 0.0
        %v627 = vsel %vm625, %v621, 0.0
        %v628 = vadd.f32 %v597, %v626
        %v629 = vadd.f32 %v598, %v627
        %s630 = sld [smem:[#allocation7 + $0x7]]
        %s631 = sld [smem:[#allocation7 + $0x10]]
        %632 = vrot.lane.b32.xlu0 %v421, 112
        %v633 = vpop.permute.xlu0 %632
        %634 = vrot.lane.b32.xlu0 %v422, 112
        %v635 = vpop.permute.xlu0 %634
        %vm636 = vcmp.lt.s32.totalorder %v438, 112
        %v637 = vsel %vm636, %v633, %v635
        %v638 = vsel %vm636, %v635, %v633
        %639 = vrot.lane.b32.xlu0 %v429, 112
        %v640 = vpop.permute.xlu0 %639
        %641 = vrot.lane.b32.xlu0 %v436, 112
        %v642 = vpop.permute.xlu0 %641
        %v643 = vsel %vm636, %v640, %v642
        %v644 = vsel %vm636, %v642, %v640
        %v645 = vstv %s630
        %v646 = vmul.f32 %v645, %v637
        %v647 = vmul.f32 %v645, %v638
        %v648 = vstv %s631
        %v649 = vmul.f32 %v648, %v643
        %v650 = vmul.f32 %v648, %v644
        %v651 = vadd.f32 %v646, %v649
        %v652 = vadd.f32 %v647, %v650
        %v653 = vsel %vm622, %v651, 0.0
        %v654 = vsel %vm623, %v652, 0.0
        %v655 = vadd.f32 %v628, %v653
        %v656 = vadd.f32 %v629, %v654
        %s657 = sld [smem:[#allocation7 + $0x8]]
        %s658 = sld [smem:[#allocation7 + $0x11]]
        %659 = vrot.lane.b32.xlu0 %v421, 111
        %v660 = vpop.permute.xlu0 %659
        %661 = vrot.lane.b32.xlu0 %v422, 111
        %v662 = vpop.permute.xlu0 %661
        %vm663 = vcmp.lt.s32.totalorder %v438, 111
        %v664 = vsel %vm663, %v660, %v662
        %v665 = vsel %vm663, %v662, %v660
        %666 = vrot.lane.b32.xlu0 %v429, 111
        %v667 = vpop.permute.xlu0 %666
        %668 = vrot.lane.b32.xlu0 %v436, 111
        %v669 = vpop.permute.xlu0 %668
        %v670 = vsel %vm663, %v667, %v669
        %v671 = vsel %vm663, %v669, %v667
        %v672 = vstv %s657
        %v673 = vmul.f32 %v672, %v664
        %v674 = vmul.f32 %v672, %v665
        %v675 = vstv %s658
        %v676 = vmul.f32 %v675, %v670
        %v677 = vmul.f32 %v675, %v671
        %v678 = vadd.f32 %v673, %v676
        %v679 = vadd.f32 %v674, %v677
        %vm680 = vmand %vm622, %vm525
        %vm681 = vmand %vm623, %vm526
        %v682 = vsel %vm680, %v678, 0.0
        %v683 = vsel %vm681, %v679, 0.0
        %v684 = vadd.f32 %v655, %v682
        %v685 = vadd.f32 %v656, %v683
        %s686 = sld [smem:[#allocation2]]
        %v687 = vstv %s686
        %v688 = vadd.f32 %v684, %v687
        %v689 = vadd.f32 %v685, %v687
        %v690 = vsub.f32 0.0, %v688
        %v691 = vsub.f32 0.0, %v689
        %v692 = vmul.f32 %v690, 1.442695
        %v693 = vpow.pop %v692
        %v694 = vmul.f32 %v691, 1.442695
        %v695 = vpow.pop %v694
        %v696 = vadd.f32 %v693, 1.0
        %v697 = vadd.f32 %v695, 1.0
        %v698 = vrcp.pop %v696
        %v699 = vmul.f32 %v696, %v698
        %v700 = vsub.f32 1.0, %v699
        %v701 = vmul.f32 %v698, %v700
        %v702 = vadd.f32 %v698, %v701
        %vm703 = vweird.f32 %v696
        %vm704 = vweird.f32 %v698
        %vm705 = vmor %vm703, %vm704
        %v706 = vsel %vm705, %v698, %v702
        %v707 = vand.u32 2147483647, %v696
        %vm708 = vcmp.eq.f32.partialorder %v707, 8.507059e+37
        %v709 = vand.u32 %v696, 2147483648
        %v710 = vor.u32 1.1754944e-38, %v709
        %v711 = vsel %vm708, %v710, %v706
        %v712 = vmul.f32 1.0, %v711
        %v713 = vrcp.pop %v697
        %v714 = vmul.f32 %v697, %v713
        %v715 = vsub.f32 1.0, %v714
        %v716 = vmul.f32 %v713, %v715
        %v717 = vadd.f32 %v713, %v716
        %vm718 = vweird.f32 %v697
        %vm719 = vweird.f32 %v713
        %vm720 = vmor %vm718, %vm719
        %v721 = vsel %vm720, %v713, %v717
        %v722 = vand.u32 2147483647, %v697
        %vm723 = vcmp.eq.f32.partialorder %v722, 8.507059e+37
        %v724 = vand.u32 %v697, 2147483648
        %v725 = vor.u32 1.1754944e-38, %v724
        %v726 = vsel %vm723, %v725, %v721
        %v727 = vmul.f32 1.0, %v726
        %v728 = vperm.slane %v712, 0
        %v729 = vperm.slane %v727, 0
        %v730 = vadd.f32 %v384, %v728
        %v731 = vadd.f32 %v384, %v729
        %v732 = vadd.f32 %v399, %v728
        %v733 = vadd.f32 %v399, %v729
        %v734 = vmul.f32 %v314, %v730
        %v735 = vmul.f32 %v315, %v731
        %v736 = vmul.f32 %v316, %v732
        %v737 = vmul.f32 %v317, %v733
        %v738 = vld [vmem:[%s4] sm:$0xff]
        %v739 = vld [vmem:[%s4 + $0x8] sm:$0xff]
        %vm740 = vcmask 130048
        %v742 = vsel %vm740, %v738, 0
        %v745 = vsel %vm740, %v739, 0
        %747 = vmatpush.msra.mxu0 0.0
        %748 = vmatpush.msra.mxu0 0.0
        %749 = vmatpush.msra.mxu0 0.0
        %750 = vmatpush.msra.mxu0 0.0
        %751 = vmatpush.msra.mxu0 0.0
        %752 = vmatpush.msra.mxu0 0.0
        %753 = vmatpush.msra.mxu0 0.0
        %754 = vmatpush.msra.mxu0 0.0
        %755 = vmatpush.msra.mxu0 0.0
        %756 = vmatpush.msra.mxu0 0.0
        %757 = vmatpush.msra.mxu0 0.0
        %758 = vmatpush.msra.mxu0 0.0
        %759 = vmatpush.msra.mxu0 0.0
        %760 = vmatpush.msra.mxu0 0.0
        %v761 = vand.u32 %v736, 4294901760
        %762 = vmatpush.msra.mxu0 %v761
        %v763 = vand.u32 %v734, 4294901760
        %764 = vmatpush.msra.mxu0 %v763
        %v765 = vand.u32 %v742, 4294901760
        %v766 = vsub.f32 %v742, %v765
        %v767 = vand.u32 %v766, 4294901760
        %v768 = vsub.f32 %v766, %v767
        %v769 = vand.u32 %v768, 4294901760
        %770 = vmatmul.f32.gmra.mxu0 %v769
        %v771 = vpop.f32.mrf.mxu0
        %v772 = vadd.f32 0.0, %v771
        %v773 = vand.u32 %v745, 4294901760
        %v774 = vsub.f32 %v745, %v773
        %v775 = vand.u32 %v774, 4294901760
        %v776 = vsub.f32 %v774, %v775
        %v777 = vand.u32 %v776, 4294901760
        %778 = vmatmul.f32.gmra.mxu0 %v777
        %v779 = vpop.f32.mrf.mxu0
        %v780 = vadd.f32 0.0, %v779
        %781 = vdwg.mxu0
        %782 = vmatpush.msra.mxu0 0.0
        %783 = vmatpush.msra.mxu0 0.0
        %784 = vmatpush.msra.mxu0 0.0
        %785 = vmatpush.msra.mxu0 0.0
        %786 = vmatpush.msra.mxu0 0.0
        %787 = vmatpush.msra.mxu0 0.0
        %788 = vmatpush.msra.mxu0 0.0
        %789 = vmatpush.msra.mxu0 0.0
        %790 = vmatpush.msra.mxu0 0.0
        %791 = vmatpush.msra.mxu0 0.0
        %792 = vmatpush.msra.mxu0 0.0
        %793 = vmatpush.msra.mxu0 0.0
        %794 = vmatpush.msra.mxu0 0.0
        %795 = vmatpush.msra.mxu0 0.0
        %v796 = vand.u32 %v736, 4294901760
        %v797 = vsub.f32 %v736, %v796
        %v798 = vand.u32 %v797, 4294901760
        %v799 = vsub.f32 %v797, %v798
        %v800 = vand.u32 %v799, 4294901760
        %801 = vmatpush.msra.mxu0 %v800
        %v802 = vand.u32 %v734, 4294901760
        %v803 = vsub.f32 %v734, %v802
        %v804 = vand.u32 %v803, 4294901760
        %v805 = vsub.f32 %v803, %v804
        %v806 = vand.u32 %v805, 4294901760
        %807 = vmatpush.msra.mxu0 %v806
        %v808 = vand.u32 %v742, 4294901760
        %809 = vmatmul.f32.gmra.mxu0 %v808
        %v810 = vpop.f32.mrf.mxu0
        %v811 = vadd.f32 %v772, %v810
        %v812 = vand.u32 %v745, 4294901760
        %813 = vmatmul.f32.gmra.mxu0 %v812
        %v814 = vpop.f32.mrf.mxu0
        %v815 = vadd.f32 %v780, %v814
        %816 = vdwg.mxu0
        %817 = vmatpush.msra.mxu0 0.0
        %818 = vmatpush.msra.mxu0 0.0
        %819 = vmatpush.msra.mxu0 0.0
        %820 = vmatpush.msra.mxu0 0.0
        %821 = vmatpush.msra.mxu0 0.0
        %822 = vmatpush.msra.mxu0 0.0
        %823 = vmatpush.msra.mxu0 0.0
        %824 = vmatpush.msra.mxu0 0.0
        %825 = vmatpush.msra.mxu0 0.0
        %826 = vmatpush.msra.mxu0 0.0
        %827 = vmatpush.msra.mxu0 0.0
        %828 = vmatpush.msra.mxu0 0.0
        %829 = vmatpush.msra.mxu0 0.0
        %830 = vmatpush.msra.mxu0 0.0
        %v831 = vand.u32 %v736, 4294901760
        %v832 = vsub.f32 %v736, %v831
        %833 = vmatpush.msra.mxu0 %v832
        %v834 = vand.u32 %v734, 4294901760
        %v835 = vsub.f32 %v734, %v834
        %836 = vmatpush.msra.mxu0 %v835
        %v837 = vand.u32 %v742, 4294901760
        %v838 = vsub.f32 %v742, %v837
        %839 = vmatmul.f32.gmra.mxu0 %v838
        %v840 = vpop.f32.mrf.mxu0
        %v841 = vadd.f32 %v811, %v840
        %v842 = vand.u32 %v745, 4294901760
        %v843 = vsub.f32 %v745, %v842
        %844 = vmatmul.f32.gmra.mxu0 %v843
        %v845 = vpop.f32.mrf.mxu0
        %v846 = vadd.f32 %v815, %v845
        %847 = vdwg.mxu0
        %848 = vmatpush.msra.mxu0 0.0
        %849 = vmatpush.msra.mxu0 0.0
        %850 = vmatpush.msra.mxu0 0.0
        %851 = vmatpush.msra.mxu0 0.0
        %852 = vmatpush.msra.mxu0 0.0
        %853 = vmatpush.msra.mxu0 0.0
        %854 = vmatpush.msra.mxu0 0.0
        %855 = vmatpush.msra.mxu0 0.0
        %856 = vmatpush.msra.mxu0 0.0
        %857 = vmatpush.msra.mxu0 0.0
        %858 = vmatpush.msra.mxu0 0.0
        %859 = vmatpush.msra.mxu0 0.0
        %860 = vmatpush.msra.mxu0 0.0
        %861 = vmatpush.msra.mxu0 0.0
        %v862 = vand.u32 %v736, 4294901760
        %863 = vmatpush.msra.mxu0 %v862
        %v864 = vand.u32 %v734, 4294901760
        %865 = vmatpush.msra.mxu0 %v864
        %v866 = vand.u32 %v742, 4294901760
        %v867 = vsub.f32 %v742, %v866
        %v868 = vand.u32 %v867, 4294901760
        %869 = vmatmul.f32.gmra.mxu0 %v868
        %v870 = vpop.f32.mrf.mxu0
        %v871 = vadd.f32 %v841, %v870
        %v872 = vand.u32 %v745, 4294901760
        %v873 = vsub.f32 %v745, %v872
        %v874 = vand.u32 %v873, 4294901760
        %875 = vmatmul.f32.gmra.mxu0 %v874
        %v876 = vpop.f32.mrf.mxu0
        %v877 = vadd.f32 %v846, %v876
        %878 = vdwg.mxu0
        %879 = vmatpush.msra.mxu0 0.0
        %880 = vmatpush.msra.mxu0 0.0
        %881 = vmatpush.msra.mxu0 0.0
        %882 = vmatpush.msra.mxu0 0.0
        %883 = vmatpush.msra.mxu0 0.0
        %884 = vmatpush.msra.mxu0 0.0
        %885 = vmatpush.msra.mxu0 0.0
        %886 = vmatpush.msra.mxu0 0.0
        %887 = vmatpush.msra.mxu0 0.0
        %888 = vmatpush.msra.mxu0 0.0
        %889 = vmatpush.msra.mxu0 0.0
        %890 = vmatpush.msra.mxu0 0.0
        %891 = vmatpush.msra.mxu0 0.0
        %892 = vmatpush.msra.mxu0 0.0
        %v893 = vand.u32 %v736, 4294901760
        %v894 = vsub.f32 %v736, %v893
        %v895 = vand.u32 %v894, 4294901760
        %896 = vmatpush.msra.mxu0 %v895
        %v897 = vand.u32 %v734, 4294901760
        %v898 = vsub.f32 %v734, %v897
        %v899 = vand.u32 %v898, 4294901760
        %900 = vmatpush.msra.mxu0 %v899
        %v901 = vand.u32 %v742, 4294901760
        %902 = vmatmul.f32.gmra.mxu0 %v901
        %v903 = vpop.f32.mrf.mxu0
        %v904 = vadd.f32 %v871, %v903
        %v905 = vand.u32 %v745, 4294901760
        %906 = vmatmul.f32.gmra.mxu0 %v905
        %v907 = vpop.f32.mrf.mxu0
        %v908 = vadd.f32 %v877, %v907
        %909 = vdwg.mxu0
        %910 = vmatpush.msra.mxu0 0.0
        %911 = vmatpush.msra.mxu0 0.0
        %912 = vmatpush.msra.mxu0 0.0
        %913 = vmatpush.msra.mxu0 0.0
        %914 = vmatpush.msra.mxu0 0.0
        %915 = vmatpush.msra.mxu0 0.0
        %916 = vmatpush.msra.mxu0 0.0
        %917 = vmatpush.msra.mxu0 0.0
        %918 = vmatpush.msra.mxu0 0.0
        %919 = vmatpush.msra.mxu0 0.0
        %920 = vmatpush.msra.mxu0 0.0
        %921 = vmatpush.msra.mxu0 0.0
        %922 = vmatpush.msra.mxu0 0.0
        %923 = vmatpush.msra.mxu0 0.0
        %v924 = vand.u32 %v736, 4294901760
        %925 = vmatpush.msra.mxu0 %v924
        %v926 = vand.u32 %v734, 4294901760
        %927 = vmatpush.msra.mxu0 %v926
        %v928 = vand.u32 %v742, 4294901760
        %929 = vmatmul.f32.gmra.mxu0 %v928
        %v930 = vpop.f32.mrf.mxu0
        %v931 = vadd.f32 %v904, %v930
        %v932 = vand.u32 %v745, 4294901760
        %933 = vmatmul.f32.gmra.mxu0 %v932
        %v934 = vpop.f32.mrf.mxu0
        %v935 = vadd.f32 %v908, %v934
        %936 = vdwg.mxu0
        %937 = vmatpush.msra.mxu0 0.0
        %938 = vmatpush.msra.mxu0 0.0
        %939 = vmatpush.msra.mxu0 0.0
        %940 = vmatpush.msra.mxu0 0.0
        %941 = vmatpush.msra.mxu0 0.0
        %942 = vmatpush.msra.mxu0 0.0
        %943 = vmatpush.msra.mxu0 0.0
        %944 = vmatpush.msra.mxu0 0.0
        %945 = vmatpush.msra.mxu0 0.0
        %946 = vmatpush.msra.mxu0 0.0
        %947 = vmatpush.msra.mxu0 0.0
        %948 = vmatpush.msra.mxu0 0.0
        %949 = vmatpush.msra.mxu0 0.0
        %950 = vmatpush.msra.mxu0 0.0
        %v951 = vand.u32 %v737, 4294901760
        %952 = vmatpush.msra.mxu0 %v951
        %v953 = vand.u32 %v735, 4294901760
        %954 = vmatpush.msra.mxu0 %v953
        %v955 = vand.u32 %v742, 4294901760
        %v956 = vsub.f32 %v742, %v955
        %v957 = vand.u32 %v956, 4294901760
        %v958 = vsub.f32 %v956, %v957
        %v959 = vand.u32 %v958, 4294901760
        %960 = vmatmul.f32.gmra.mxu0 %v959
        %v961 = vpop.f32.mrf.mxu0
        %v962 = vadd.f32 0.0, %v961
        %v963 = vand.u32 %v745, 4294901760
        %v964 = vsub.f32 %v745, %v963
        %v965 = vand.u32 %v964, 4294901760
        %v966 = vsub.f32 %v964, %v965
        %v967 = vand.u32 %v966, 4294901760
        %968 = vmatmul.f32.gmra.mxu0 %v967
        %v969 = vpop.f32.mrf.mxu0
        %v970 = vadd.f32 0.0, %v969
        %971 = vdwg.mxu0
        %972 = vmatpush.msra.mxu0 0.0
        %973 = vmatpush.msra.mxu0 0.0
        %974 = vmatpush.msra.mxu0 0.0
        %975 = vmatpush.msra.mxu0 0.0
        %976 = vmatpush.msra.mxu0 0.0
        %977 = vmatpush.msra.mxu0 0.0
        %978 = vmatpush.msra.mxu0 0.0
        %979 = vmatpush.msra.mxu0 0.0
        %980 = vmatpush.msra.mxu0 0.0
        %981 = vmatpush.msra.mxu0 0.0
        %982 = vmatpush.msra.mxu0 0.0
        %983 = vmatpush.msra.mxu0 0.0
        %984 = vmatpush.msra.mxu0 0.0
        %985 = vmatpush.msra.mxu0 0.0
        %v986 = vand.u32 %v737, 4294901760
        %v987 = vsub.f32 %v737, %v986
        %v988 = vand.u32 %v987, 4294901760
        %v989 = vsub.f32 %v987, %v988
        %v990 = vand.u32 %v989, 4294901760
        %991 = vmatpush.msra.mxu0 %v990
        %v992 = vand.u32 %v735, 4294901760
        %v993 = vsub.f32 %v735, %v992
        %v994 = vand.u32 %v993, 4294901760
        %v995 = vsub.f32 %v993, %v994
        %v996 = vand.u32 %v995, 4294901760
        %997 = vmatpush.msra.mxu0 %v996
        %v998 = vand.u32 %v742, 4294901760
        %999 = vmatmul.f32.gmra.mxu0 %v998
        %v1000 = vpop.f32.mrf.mxu0
        %v1001 = vadd.f32 %v962, %v1000
        %v1002 = vand.u32 %v745, 4294901760
        %1003 = vmatmul.f32.gmra.mxu0 %v1002
        %v1004 = vpop.f32.mrf.mxu0
        %v1005 = vadd.f32 %v970, %v1004
        %1006 = vdwg.mxu0
        %1007 = vmatpush.msra.mxu0 0.0
        %1008 = vmatpush.msra.mxu0 0.0
        %1009 = vmatpush.msra.mxu0 0.0
        %1010 = vmatpush.msra.mxu0 0.0
        %1011 = vmatpush.msra.mxu0 0.0
        %1012 = vmatpush.msra.mxu0 0.0
        %1013 = vmatpush.msra.mxu0 0.0
        %1014 = vmatpush.msra.mxu0 0.0
        %1015 = vmatpush.msra.mxu0 0.0
        %1016 = vmatpush.msra.mxu0 0.0
        %1017 = vmatpush.msra.mxu0 0.0
        %1018 = vmatpush.msra.mxu0 0.0
        %1019 = vmatpush.msra.mxu0 0.0
        %1020 = vmatpush.msra.mxu0 0.0
        %v1021 = vand.u32 %v737, 4294901760
        %v1022 = vsub.f32 %v737, %v1021
        %1023 = vmatpush.msra.mxu0 %v1022
        %v1024 = vand.u32 %v735, 4294901760
        %v1025 = vsub.f32 %v735, %v1024
        %1026 = vmatpush.msra.mxu0 %v1025
        %v1027 = vand.u32 %v742, 4294901760
        %v1028 = vsub.f32 %v742, %v1027
        %1029 = vmatmul.f32.gmra.mxu0 %v1028
        %v1030 = vpop.f32.mrf.mxu0
        %v1031 = vadd.f32 %v1001, %v1030
        %v1032 = vand.u32 %v745, 4294901760
        %v1033 = vsub.f32 %v745, %v1032
        %1034 = vmatmul.f32.gmra.mxu0 %v1033
        %v1035 = vpop.f32.mrf.mxu0
        %v1036 = vadd.f32 %v1005, %v1035
        %1037 = vdwg.mxu0
        %1038 = vmatpush.msra.mxu0 0.0
        %1039 = vmatpush.msra.mxu0 0.0
        %1040 = vmatpush.msra.mxu0 0.0
        %1041 = vmatpush.msra.mxu0 0.0
        %1042 = vmatpush.msra.mxu0 0.0
        %1043 = vmatpush.msra.mxu0 0.0
        %1044 = vmatpush.msra.mxu0 0.0
        %1045 = vmatpush.msra.mxu0 0.0
        %1046 = vmatpush.msra.mxu0 0.0
        %1047 = vmatpush.msra.mxu0 0.0
        %1048 = vmatpush.msra.mxu0 0.0
        %1049 = vmatpush.msra.mxu0 0.0
        %1050 = vmatpush.msra.mxu0 0.0
        %1051 = vmatpush.msra.mxu0 0.0
        %v1052 = vand.u32 %v737, 4294901760
        %1053 = vmatpush.msra.mxu0 %v1052
        %v1054 = vand.u32 %v735, 4294901760
        %1055 = vmatpush.msra.mxu0 %v1054
        %v1056 = vand.u32 %v742, 4294901760
        %v1057 = vsub.f32 %v742, %v1056
        %v1058 = vand.u32 %v1057, 4294901760
        %1059 = vmatmul.f32.gmra.mxu0 %v1058
        %v1060 = vpop.f32.mrf.mxu0
        %v1061 = vadd.f32 %v1031, %v1060
        %v1062 = vand.u32 %v745, 4294901760
        %v1063 = vsub.f32 %v745, %v1062
        %v1064 = vand.u32 %v1063, 4294901760
        %1065 = vmatmul.f32.gmra.mxu0 %v1064
        %v1066 = vpop.f32.mrf.mxu0
        %v1067 = vadd.f32 %v1036, %v1066
        %1068 = vdwg.mxu0
        %1069 = vmatpush.msra.mxu0 0.0
        %1070 = vmatpush.msra.mxu0 0.0
        %1071 = vmatpush.msra.mxu0 0.0
        %1072 = vmatpush.msra.mxu0 0.0
        %1073 = vmatpush.msra.mxu0 0.0
        %1074 = vmatpush.msra.mxu0 0.0
        %1075 = vmatpush.msra.mxu0 0.0
        %1076 = vmatpush.msra.mxu0 0.0
        %1077 = vmatpush.msra.mxu0 0.0
        %1078 = vmatpush.msra.mxu0 0.0
        %1079 = vmatpush.msra.mxu0 0.0
        %1080 = vmatpush.msra.mxu0 0.0
        %1081 = vmatpush.msra.mxu0 0.0
        %1082 = vmatpush.msra.mxu0 0.0
        %v1083 = vand.u32 %v737, 4294901760
        %v1084 = vsub.f32 %v737, %v1083
        %v1085 = vand.u32 %v1084, 4294901760
        %1086 = vmatpush.msra.mxu0 %v1085
        %v1087 = vand.u32 %v735, 4294901760
        %v1088 = vsub.f32 %v735, %v1087
        %v1089 = vand.u32 %v1088, 4294901760
        %1090 = vmatpush.msra.mxu0 %v1089
        %v1091 = vand.u32 %v742, 4294901760
        %1092 = vmatmul.f32.gmra.mxu0 %v1091
        %v1093 = vpop.f32.mrf.mxu0
        %v1094 = vadd.f32 %v1061, %v1093
        %v1095 = vand.u32 %v745, 4294901760
        %1096 = vmatmul.f32.gmra.mxu0 %v1095
        %v1097 = vpop.f32.mrf.mxu0
        %v1098 = vadd.f32 %v1067, %v1097
        %1099 = vdwg.mxu0
        %1100 = vmatpush.msra.mxu0 0.0
        %1101 = vmatpush.msra.mxu0 0.0
        %1102 = vmatpush.msra.mxu0 0.0
        %1103 = vmatpush.msra.mxu0 0.0
        %1104 = vmatpush.msra.mxu0 0.0
        %1105 = vmatpush.msra.mxu0 0.0
        %1106 = vmatpush.msra.mxu0 0.0
        %1107 = vmatpush.msra.mxu0 0.0
        %1108 = vmatpush.msra.mxu0 0.0
        %1109 = vmatpush.msra.mxu0 0.0
        %1110 = vmatpush.msra.mxu0 0.0
        %1111 = vmatpush.msra.mxu0 0.0
        %1112 = vmatpush.msra.mxu0 0.0
        %1113 = vmatpush.msra.mxu0 0.0
        %v1114 = vand.u32 %v737, 4294901760
        %1115 = vmatpush.msra.mxu0 %v1114
        %v1116 = vand.u32 %v735, 4294901760
        %1117 = vmatpush.msra.mxu0 %v1116
        %v1118 = vand.u32 %v742, 4294901760
        %1119 = vmatmul.f32.gmra.mxu0 %v1118
        %v1120 = vpop.f32.mrf.mxu0
        %v1121 = vadd.f32 %v1094, %v1120
        %v1122 = vand.u32 %v745, 4294901760
        %1123 = vmatmul.f32.gmra.mxu0 %v1122
        %v1124 = vpop.f32.mrf.mxu0
        %v1125 = vadd.f32 %v1098, %v1124
        %1126 = vdwg.mxu0
        %v1127 = vadd.f32 %v314, %v931
        %v1128 = vadd.f32 %v315, %v1121
        %v1129 = vadd.f32 %v316, %v935
        %v1130 = vadd.f32 %v317, %v1125
        %1131 = vst [vmem:[%s313] sm:$0xff] %v1127
        %1132 = vst [vmem:[%s313 + $0x8] sm:$0xff] %v1128
        %1133 = vst [vmem:[%s313 + $0x10] sm:$0xff] %v1129
        %1134 = vst [vmem:[%s313 + $0x18] sm:$0xff] %v1130
        %s1135 = sand.u32 %s186, 1
        %s1136 = scalar_lea.sflag [#allocation5], %s1135
        %s1137 = sand.u32 %s186, 1
        %s1138 = smul.addr %s1137, 32
        %s1139 = scalar_lea.vmem [#allocation8], %s1138
        // Predicated region
        $region57: #{tpu_custom_call.1} parent=47 // pred_check
          %p1140 = pneg %p196
        $region58: #{tpu_custom_call.1} parent=47 // pred_check_branch
          %1142 = sbr.rel (%p1140) target = $region60
        $region59: #{tpu_custom_call.1} parent=47 // pred_region
          %1144 = vsyncadd %s1136, 0
          %s1145 = smul.addr %s26, 4
          %s1146 = smul.addr %s1145, 8
          %s1147 = scalar_lea.hbm %s7, %s1146
          %s1148 = sshll.u32 %s1139, 4
          %s1149 = int_to_ptr.vmem [resolvable:$true] %s1148
          %s1150 = sshll.u32 %s1147, 4
          %s1151 = int_to_ptr.hbm [resolvable:$true] %s1150
          %1156 = dma.vmem_to_hbm [thread:$0]  %s1149, 512, %s1151, %s1136, 256, 256, 16
        $region60: #{tpu_custom_call.1} parent=47 // pred_fallthru
          _
      $region48: #{tpu_custom_call.1} parent=5 // pred_fallthru
        _
      %p1157 = scmp.le.s32.totalorder 2, %s21
      // Predicated region
      $region61: #{tpu_custom_call.1} parent=5 // pred_check
        %p1158 = pneg %p1157
      $region62: #{tpu_custom_call.1} parent=5 // pred_check_branch
        %1160 = sbr.rel (%p1158) target = $region64
      $region63: #{tpu_custom_call.1} parent=5 // pred_region
        %s1161 = ssub.s32 %s21, 2
        // Predicated region
        $region65: #{tpu_custom_call.1} parent=63 // pred_check
          %p1162 = pneg %p202
        $region66: #{tpu_custom_call.1} parent=63 // pred_check_branch
          %1164 = sbr.rel (%p1162) target = $region68
        $region67: #{tpu_custom_call.1} parent=63 // pred_region
          %s1165 = sand.u32 %s187, 1
          %s1166 = scalar_lea.sflag [#allocation5], %s1165
          %s1167 = sand.u32 %s187, 1
          %s1168 = smul.addr %s1167, 32
          %s1169 = scalar_lea.vmem [#allocation8], %s1168
          %1171 = dma.done %s1166, 512
        $region68: #{tpu_custom_call.1} parent=63 // pred_fallthru
          _
      $region64: #{tpu_custom_call.1} parent=5 // pred_fallthru
        _
    $region6: #{tpu_custom_call.1} parent=1 // loop_footer
      %s25 = sadd.s32 1, %s21
    $region7: #{tpu_custom_call.1} parent=1 // loop_footer_branch
      %20 = sbr.rel target = $region3
    $region8: #{tpu_custom_call.1} parent=1 // loop_exit
      _
    %1172 = vsyncpa [#allocation4], 1
    %s1173 = scalar_lea.sflag [#allocation4], 1
    %1174 = vsyncpa %s1173, 1
    %1175 = vsyncpa [#allocation5], 1
    %s1176 = scalar_lea.sflag [#allocation5], 1
    %1177 = vsyncpa %s1176, 1
    %1178 = vsyncpa [#allocation6], 1
    %s1179 = scalar_lea.sflag [#allocation6], 1
    %1180 = vsyncpa %s1179, 1

</llo_original>
